<compile_context>
chip_gen: v5e
topology: v5e:2x2
jax: 0.10.0
libtpu: 0.0.40
codegen_flags: <defaults>
</compile_context>

<pallas_src>
import jax
import jax.numpy as jnp
import numpy as np
from jax.experimental import pallas as pl
from jax.experimental.pallas import tpu as pltpu


def _blstn_kernel(x_ref,          # (B, T, D)   bf16
                  wih_ref,        # (D, 8H)     bf16   [fwd i|f|g|o | bwd i|f|g|o]
                  whh_f_ref,      # (H, 4H)     bf16
                  whh_b_ref,      # (H, 4H)     bf16
                  b_ref,          # (1, 8H)     f32    (b_ih + b_hh, both dirs)
                  fcw_ref,        # (2H, O)     bf16
                  fcb_ref,        # (1, O)      f32
                  out_ref):       # (B, O)      f32
    """Whole forward pass in one kernel invocation (everything fits in VMEM)."""
    B, T, D = x_ref.shape
    H4 = whh_f_ref.shape[-1]
    H = H4 // 4

    # ---- Hoisted input projection for BOTH directions, bias folded in. ----
    # One well-shaped matmul (M = B*T, N = 8H) replaces T*8 tiny per-step ones.
    x_flat = x_ref[...].reshape(B * T, D)                       # bf16
    xp = (jnp.dot(x_flat, wih_ref[...],
                  preferred_element_type=jnp.float32)
          + b_ref[...])                                         # (B*T, 8H) f32
    xp = xp.reshape(B, T, 2 * H4)

    whh_f = whh_f_ref[...]                                      # bf16 (H, 4H)
    whh_b = whh_b_ref[...]

    h_f = jnp.zeros((B, H), jnp.float32)
    c_f = jnp.zeros((B, H), jnp.float32)
    h_b = jnp.zeros((B, H), jnp.float32)
    c_b = jnp.zeros((B, H), jnp.float32)

    def cell(gates, c):
        # gates: (B, 4H) f32, lane-dense fused gate tensor; slice lazily.
        i_g = jax.nn.sigmoid(gates[:, 0 * H:1 * H])
        f_g = jax.nn.sigmoid(gates[:, 1 * H:2 * H])
        g_g = jnp.tanh(gates[:, 2 * H:3 * H])
        o_g = jax.nn.sigmoid(gates[:, 3 * H:4 * H])
        c_new = f_g * c + i_g * g_g
        h_new = o_g * jnp.tanh(c_new)
        return h_new, c_new

    # T is small & static: fully unroll; interleave the two independent
    # direction chains in one body so their latencies overlap.
    # TODO(synk): switch to lax.fori_loop (unroll=2-4) with an (h,c) carry if
    # T grows beyond ~16.
    for s in range(T):
        gates_f = (xp[:, s, :H4]
                   + jnp.dot(h_f.astype(jnp.bfloat16), whh_f,
                             preferred_element_type=jnp.float32))
        gates_b = (xp[:, T - 1 - s, H4:]
                   + jnp.dot(h_b.astype(jnp.bfloat16), whh_b,
                             preferred_element_type=jnp.float32))
        h_f, c_f = cell(gates_f, c_f)
        h_b, c_b = cell(gates_b, c_b)

    # concat(h[-2], h[-1]) -> Linear
    h_cat = jnp.concatenate([h_f, h_b], axis=1)                 # (B, 2H) f32
    out = (jnp.dot(h_cat.astype(jnp.bfloat16), fcw_ref[...],
                   preferred_element_type=jnp.float32)
           + fcb_ref[...])                                      # (B, O) f32
    out_ref[...] = out.astype(out_ref.dtype)


def blstn_forward(x, params):
    """x: (B, T, D) float32. Returns (B, output_size) float32."""
    B, T, D = x.shape
    O = params["fcw"].shape[-1]
    bf16 = jnp.bfloat16

    vmem = pl.BlockSpec(memory_space=pltpu.MemorySpace.VMEM)
    return pl.pallas_call(
        _blstn_kernel,
        out_shape=jax.ShapeDtypeStruct((B, O), jnp.float32),
        in_specs=[vmem] * 7,
        out_specs=vmem,
    )(x.astype(bf16),
      params["wih"].astype(bf16),
      params["whh_f"].astype(bf16),
      params["whh_b"].astype(bf16),
      params["b"],
      params["fcw"].astype(bf16),
      params["fcb"])


def init_params(key, input_size, hidden_size, output_size):
    """Deterministic synthetic parameters; same shapes as the PyTorch module."""
    H, D, O = hidden_size, input_size, output_size
    ks = jax.random.split(key, 10)
    s = 1.0 / np.sqrt(H)

    def u(k, shape):
        return jax.random.uniform(k, shape, jnp.float32, -s, s)

    # PyTorch-native shapes: weight_ih (4H, D), weight_hh (4H, H), biases (4H,)
    w_ih_f, w_hh_f = u(ks[0], (4 * H, D)), u(ks[1], (4 * H, H))
    b_ih_f, b_hh_f = u(ks[2], (4 * H,)), u(ks[3], (4 * H,))
    w_ih_b, w_hh_b = u(ks[4], (4 * H, D)), u(ks[5], (4 * H, H))
    b_ih_b, b_hh_b = u(ks[6], (4 * H,)), u(ks[7], (4 * H,))
    fc_w, fc_b = u(ks[8], (O, 2 * H)), u(ks[9], (O,))

    # Fused packing: wih (D, 8H) = [fwd i|f|g|o | bwd i|f|g|o]; whh (H, 4H)
    # per direction; combined bias (1, 8H).
    wih = jnp.concatenate([w_ih_f.T, w_ih_b.T], axis=1)         # (D, 8H)
    whh_f = w_hh_f.T                                            # (H, 4H)
    whh_b = w_hh_b.T                                            # (H, 4H)
    b = jnp.concatenate([b_ih_f + b_hh_f, b_ih_b + b_hh_b]).reshape(1, 8 * H)
    return dict(wih=wih, whh_f=whh_f, whh_b=whh_b, b=b,
                fcw=jnp.transpose(fc_w),                        # (2H, O)
                fcb=fc_b.reshape(1, O))


def _reference_forward(x, params):
    """Pure-JAX f32 reference implementing the same math (sanity check)."""
    B, T, D = x.shape
    H = params["whh_f"].shape[0]
    H4 = 4 * H
    b_all = params["b"][0]

    def run(wih_d, whh, b_d, reverse):
        h = jnp.zeros((B, H), jnp.float32)
        c = jnp.zeros((B, H), jnp.float32)
        steps = range(T - 1, -1, -1) if reverse else range(T)
        for t in steps:
            gates = x[:, t, :] @ wih_d + h @ whh + b_d[None, :]
            i_g = jax.nn.sigmoid(gates[:, 0 * H:1 * H])
            f_g = jax.nn.sigmoid(gates[:, 1 * H:2 * H])
            g_g = jnp.tanh(gates[:, 2 * H:3 * H])
            o_g = jax.nn.sigmoid(gates[:, 3 * H:4 * H])
            c = f_g * c + i_g * g_g
            h = o_g * jnp.tanh(c)
        return h

    h_f = run(params["wih"][:, :H4], params["whh_f"], b_all[:H4], False)
    h_b = run(params["wih"][:, H4:], params["whh_b"], b_all[H4:], True)
    return jnp.concatenate([h_f, h_b], axis=1) @ params["fcw"] + params["fcb"]


if __name__ == "__main__":
    B, T, D, H, O = 2, 8, 16, 32, 8

    key = jax.random.PRNGKey(0)
    k_x, k_p = jax.random.split(key)
    x = jax.random.normal(k_x, (B, T, D), jnp.float32)
    params = init_params(k_p, input_size=D, hidden_size=H, output_size=O)

    out = blstn_forward(x, params)
    out = jax.block_until_ready(out)

    ref = np.asarray(_reference_forward(x, params))
    np.testing.assert_allclose(np.asarray(out), ref, atol=1e-2, rtol=1e-2)

    print("KERNEL_OK")
</pallas_src>

<mosaic_0001>
module attributes {stable_mosaic.version = 11 : i64} {
  func.func @_blstn_kernel(%arg0: memref<2x8x16xbf16, #tpu.memory_space<vmem>>, %arg1: memref<16x256xbf16, #tpu.memory_space<vmem>>, %arg2: memref<32x128xbf16, #tpu.memory_space<vmem>>, %arg3: memref<32x128xbf16, #tpu.memory_space<vmem>>, %arg4: memref<1x256xf32, #tpu.memory_space<vmem>>, %arg5: memref<64x8xbf16, #tpu.memory_space<vmem>>, %arg6: memref<1x8xf32, #tpu.memory_space<vmem>>, %arg7: memref<2x8xf32, #tpu.memory_space<vmem>>) attributes {dimension_semantics = [], scalar_prefetch = 0 : i64, scratch_operands = 0 : i64, tpu.core_type = #tpu.core_type<tc>} {
    %c0 = arith.constant 0 : index
    %c0_0 = arith.constant 0 : index
    %c0_1 = arith.constant 0 : index
    %0 = vector.load %arg0[%c0, %c0_0, %c0_1] : memref<2x8x16xbf16, #tpu.memory_space<vmem>>, vector<2x8x16xbf16>
    %1 = vector.shape_cast %0 : vector<2x8x16xbf16> to vector<16x16xbf16>
    %c0_2 = arith.constant 0 : index
    %c0_3 = arith.constant 0 : index
    %2 = vector.load %arg1[%c0_2, %c0_3] : memref<16x256xbf16, #tpu.memory_space<vmem>>, vector<16x256xbf16>
    %cst = arith.constant dense<0.000000e+00> : vector<16x256xf32>
    %3 = tpu.matmul %1, %2, %cst {dimension_numbers = #tpu.dot_dimension_numbers<[1], [0], [0], [1], [0, 0, 1, 1], [], []>} : vector<16x16xbf16>, vector<16x256xbf16>, vector<16x256xf32> -> vector<16x256xf32>
    %c0_4 = arith.constant 0 : index
    %c0_5 = arith.constant 0 : index
    %4 = vector.load %arg4[%c0_4, %c0_5] : memref<1x256xf32, #tpu.memory_space<vmem>>, vector<1x256xf32>
    %5 = vector.broadcast %4 : vector<1x256xf32> to vector<16x256xf32>
    %6 = arith.addf %3, %5 : vector<16x256xf32>
    %7 = vector.shape_cast %6 : vector<16x256xf32> to vector<2x8x256xf32>
    %c0_6 = arith.constant 0 : index
    %c0_7 = arith.constant 0 : index
    %8 = vector.load %arg2[%c0_6, %c0_7] : memref<32x128xbf16, #tpu.memory_space<vmem>>, vector<32x128xbf16>
    %c0_8 = arith.constant 0 : index
    %c0_9 = arith.constant 0 : index
    %9 = vector.load %arg3[%c0_8, %c0_9] : memref<32x128xbf16, #tpu.memory_space<vmem>>, vector<32x128xbf16>
    %cst_10 = arith.constant 0.000000e+00 : f32
    %10 = vector.broadcast %cst_10 : f32 to vector<2x32xf32>
    %cst_11 = arith.constant 0.000000e+00 : f32
    %11 = vector.broadcast %cst_11 : f32 to vector<2x32xf32>
    %cst_12 = arith.constant 0.000000e+00 : f32
    %12 = vector.broadcast %cst_12 : f32 to vector<2x32xf32>
    %cst_13 = arith.constant 0.000000e+00 : f32
    %13 = vector.broadcast %cst_13 : f32 to vector<2x32xf32>
    %14 = vector.extract_strided_slice %7 {offsets = [0, 0, 0], sizes = [2, 1, 128], strides = [1, 1, 1]} : vector<2x8x256xf32> to vector<2x1x128xf32>
    %15 = vector.shape_cast %14 : vector<2x1x128xf32> to vector<2x128xf32>
    %16 = arith.truncf %10 : vector<2x32xf32> to vector<2x32xbf16>
    %cst_14 = arith.constant dense<0.000000e+00> : vector<2x128xf32>
    %17 = tpu.matmul %16, %8, %cst_14 {dimension_numbers = #tpu.dot_dimension_numbers<[1], [0], [0], [1], [0, 0, 1, 1], [], []>} : vector<2x32xbf16>, vector<32x128xbf16>, vector<2x128xf32> -> vector<2x128xf32>
    %18 = arith.addf %15, %17 : vector<2x128xf32>
    %19 = vector.extract_strided_slice %7 {offsets = [0, 7, 128], sizes = [2, 1, 128], strides = [1, 1, 1]} : vector<2x8x256xf32> to vector<2x1x128xf32>
    %20 = vector.shape_cast %19 : vector<2x1x128xf32> to vector<2x128xf32>
    %21 = arith.truncf %12 : vector<2x32xf32> to vector<2x32xbf16>
    %cst_15 = arith.constant dense<0.000000e+00> : vector<2x128xf32>
    %22 = tpu.matmul %21, %9, %cst_15 {dimension_numbers = #tpu.dot_dimension_numbers<[1], [0], [0], [1], [0, 0, 1, 1], [], []>} : vector<2x32xbf16>, vector<32x128xbf16>, vector<2x128xf32> -> vector<2x128xf32>
    %23 = arith.addf %20, %22 : vector<2x128xf32>
    %24 = vector.extract_strided_slice %18 {offsets = [0, 0], sizes = [2, 32], strides = [1, 1]} : vector<2x128xf32> to vector<2x32xf32>
    %25 = arith.negf %24 : vector<2x32xf32>
    %26 = math.exp %25 : vector<2x32xf32>
    %cst_16 = arith.constant 1.000000e+00 : f32
    %27 = vector.broadcast %cst_16 : f32 to vector<2x32xf32>
    %28 = arith.addf %27, %26 : vector<2x32xf32>
    %29 = arith.divf %27, %28 : vector<2x32xf32>
    %30 = vector.extract_strided_slice %18 {offsets = [0, 32], sizes = [2, 32], strides = [1, 1]} : vector<2x128xf32> to vector<2x32xf32>
    %31 = arith.negf %30 : vector<2x32xf32>
    %32 = math.exp %31 : vector<2x32xf32>
    %cst_17 = arith.constant 1.000000e+00 : f32
    %33 = vector.broadcast %cst_17 : f32 to vector<2x32xf32>
    %34 = arith.addf %33, %32 : vector<2x32xf32>
    %35 = arith.divf %33, %34 : vector<2x32xf32>
    %36 = vector.extract_strided_slice %18 {offsets = [0, 64], sizes = [2, 32], strides = [1, 1]} : vector<2x128xf32> to vector<2x32xf32>
    %37 = math.tanh %36 : vector<2x32xf32>
    %38 = vector.extract_strided_slice %18 {offsets = [0, 96], sizes = [2, 32], strides = [1, 1]} : vector<2x128xf32> to vector<2x32xf32>
    %39 = arith.negf %38 : vector<2x32xf32>
    %40 = math.exp %39 : vector<2x32xf32>
    %cst_18 = arith.constant 1.000000e+00 : f32
    %41 = vector.broadcast %cst_18 : f32 to vector<2x32xf32>
    %42 = arith.addf %41, %40 : vector<2x32xf32>
    %43 = arith.divf %41, %42 : vector<2x32xf32>
    %44 = arith.mulf %35, %11 : vector<2x32xf32>
    %45 = arith.mulf %29, %37 : vector<2x32xf32>
    %46 = arith.addf %44, %45 : vector<2x32xf32>
    %47 = math.tanh %46 : vector<2x32xf32>
    %48 = arith.mulf %43, %47 : vector<2x32xf32>
    %49 = vector.extract_strided_slice %23 {offsets = [0, 0], sizes = [2, 32], strides = [1, 1]} : vector<2x128xf32> to vector<2x32xf32>
    %50 = arith.negf %49 : vector<2x32xf32>
    %51 = math.exp %50 : vector<2x32xf32>
    %cst_19 = arith.constant 1.000000e+00 : f32
    %52 = vector.broadcast %cst_19 : f32 to vector<2x32xf32>
    %53 = arith.addf %52, %51 : vector<2x32xf32>
    %54 = arith.divf %52, %53 : vector<2x32xf32>
    %55 = vector.extract_strided_slice %23 {offsets = [0, 32], sizes = [2, 32], strides = [1, 1]} : vector<2x128xf32> to vector<2x32xf32>
    %56 = arith.negf %55 : vector<2x32xf32>
    %57 = math.exp %56 : vector<2x32xf32>
    %cst_20 = arith.constant 1.000000e+00 : f32
    %58 = vector.broadcast %cst_20 : f32 to vector<2x32xf32>
    %59 = arith.addf %58, %57 : vector<2x32xf32>
    %60 = arith.divf %58, %59 : vector<2x32xf32>
    %61 = vector.extract_strided_slice %23 {offsets = [0, 64], sizes = [2, 32], strides = [1, 1]} : vector<2x128xf32> to vector<2x32xf32>
    %62 = math.tanh %61 : vector<2x32xf32>
    %63 = vector.extract_strided_slice %23 {offsets = [0, 96], sizes = [2, 32], strides = [1, 1]} : vector<2x128xf32> to vector<2x32xf32>
    %64 = arith.negf %63 : vector<2x32xf32>
    %65 = math.exp %64 : vector<2x32xf32>
    %cst_21 = arith.constant 1.000000e+00 : f32
    %66 = vector.broadcast %cst_21 : f32 to vector<2x32xf32>
    %67 = arith.addf %66, %65 : vector<2x32xf32>
    %68 = arith.divf %66, %67 : vector<2x32xf32>
    %69 = arith.mulf %60, %13 : vector<2x32xf32>
    %70 = arith.mulf %54, %62 : vector<2x32xf32>
    %71 = arith.addf %69, %70 : vector<2x32xf32>
    %72 = math.tanh %71 : vector<2x32xf32>
    %73 = arith.mulf %68, %72 : vector<2x32xf32>
    %74 = vector.extract_strided_slice %7 {offsets = [0, 1, 0], sizes = [2, 1, 128], strides = [1, 1, 1]} : vector<2x8x256xf32> to vector<2x1x128xf32>
    %75 = vector.shape_cast %74 : vector<2x1x128xf32> to vector<2x128xf32>
    %76 = arith.truncf %48 : vector<2x32xf32> to vector<2x32xbf16>
    %cst_22 = arith.constant dense<0.000000e+00> : vector<2x128xf32>
    %77 = tpu.matmul %76, %8, %cst_22 {dimension_numbers = #tpu.dot_dimension_numbers<[1], [0], [0], [1], [0, 0, 1, 1], [], []>} : vector<2x32xbf16>, vector<32x128xbf16>, vector<2x128xf32> -> vector<2x128xf32>
    %78 = arith.addf %75, %77 : vector<2x128xf32>
    %79 = vector.extract_strided_slice %7 {offsets = [0, 6, 128], sizes = [2, 1, 128], strides = [1, 1, 1]} : vector<2x8x256xf32> to vector<2x1x128xf32>
    %80 = vector.shape_cast %79 : vector<2x1x128xf32> to vector<2x128xf32>
    %81 = arith.truncf %73 : vector<2x32xf32> to vector<2x32xbf16>
    %cst_23 = arith.constant dense<0.000000e+00> : vector<2x128xf32>
    %82 = tpu.matmul %81, %9, %cst_23 {dimension_numbers = #tpu.dot_dimension_numbers<[1], [0], [0], [1], [0, 0, 1, 1], [], []>} : vector<2x32xbf16>, vector<32x128xbf16>, vector<2x128xf32> -> vector<2x128xf32>
    %83 = arith.addf %80, %82 : vector<2x128xf32>
    %84 = vector.extract_strided_slice %78 {offsets = [0, 0], sizes = [2, 32], strides = [1, 1]} : vector<2x128xf32> to vector<2x32xf32>
    %85 = arith.negf %84 : vector<2x32xf32>
    %86 = math.exp %85 : vector<2x32xf32>
    %cst_24 = arith.constant 1.000000e+00 : f32
    %87 = vector.broadcast %cst_24 : f32 to vector<2x32xf32>
    %88 = arith.addf %87, %86 : vector<2x32xf32>
    %89 = arith.divf %87, %88 : vector<2x32xf32>
    %90 = vector.extract_strided_slice %78 {offsets = [0, 32], sizes = [2, 32], strides = [1, 1]} : vector<2x128xf32> to vector<2x32xf32>
    %91 = arith.negf %90 : vector<2x32xf32>
    %92 = math.exp %91 : vector<2x32xf32>
    %cst_25 = arith.constant 1.000000e+00 : f32
    %93 = vector.broadcast %cst_25 : f32 to vector<2x32xf32>
    %94 = arith.addf %93, %92 : vector<2x32xf32>
    %95 = arith.divf %93, %94 : vector<2x32xf32>
    %96 = vector.extract_strided_slice %78 {offsets = [0, 64], sizes = [2, 32], strides = [1, 1]} : vector<2x128xf32> to vector<2x32xf32>
    %97 = math.tanh %96 : vector<2x32xf32>
    %98 = vector.extract_strided_slice %78 {offsets = [0, 96], sizes = [2, 32], strides = [1, 1]} : vector<2x128xf32> to vector<2x32xf32>
    %99 = arith.negf %98 : vector<2x32xf32>
    %100 = math.exp %99 : vector<2x32xf32>
    %cst_26 = arith.constant 1.000000e+00 : f32
    %101 = vector.broadcast %cst_26 : f32 to vector<2x32xf32>
    %102 = arith.addf %101, %100 : vector<2x32xf32>
    %103 = arith.divf %101, %102 : vector<2x32xf32>
    %104 = arith.mulf %95, %46 : vector<2x32xf32>
    %105 = arith.mulf %89, %97 : vector<2x32xf32>
    %106 = arith.addf %104, %105 : vector<2x32xf32>
    %107 = math.tanh %106 : vector<2x32xf32>
    %108 = arith.mulf %103, %107 : vector<2x32xf32>
    %109 = vector.extract_strided_slice %83 {offsets = [0, 0], sizes = [2, 32], strides = [1, 1]} : vector<2x128xf32> to vector<2x32xf32>
    %110 = arith.negf %109 : vector<2x32xf32>
    %111 = math.exp %110 : vector<2x32xf32>
    %cst_27 = arith.constant 1.000000e+00 : f32
    %112 = vector.broadcast %cst_27 : f32 to vector<2x32xf32>
    %113 = arith.addf %112, %111 : vector<2x32xf32>
    %114 = arith.divf %112, %113 : vector<2x32xf32>
    %115 = vector.extract_strided_slice %83 {offsets = [0, 32], sizes = [2, 32], strides = [1, 1]} : vector<2x128xf32> to vector<2x32xf32>
    %116 = arith.negf %115 : vector<2x32xf32>
    %117 = math.exp %116 : vector<2x32xf32>
    %cst_28 = arith.constant 1.000000e+00 : f32
    %118 = vector.broadcast %cst_28 : f32 to vector<2x32xf32>
    %119 = arith.addf %118, %117 : vector<2x32xf32>
    %120 = arith.divf %118, %119 : vector<2x32xf32>
    %121 = vector.extract_strided_slice %83 {offsets = [0, 64], sizes = [2, 32], strides = [1, 1]} : vector<2x128xf32> to vector<2x32xf32>
    %122 = math.tanh %121 : vector<2x32xf32>
    %123 = vector.extract_strided_slice %83 {offsets = [0, 96], sizes = [2, 32], strides = [1, 1]} : vector<2x128xf32> to vector<2x32xf32>
    %124 = arith.negf %123 : vector<2x32xf32>
    %125 = math.exp %124 : vector<2x32xf32>
    %cst_29 = arith.constant 1.000000e+00 : f32
    %126 = vector.broadcast %cst_29 : f32 to vector<2x32xf32>
    %127 = arith.addf %126, %125 : vector<2x32xf32>
    %128 = arith.divf %126, %127 : vector<2x32xf32>
    %129 = arith.mulf %120, %71 : vector<2x32xf32>
    %130 = arith.mulf %114, %122 : vector<2x32xf32>
    %131 = arith.addf %129, %130 : vector<2x32xf32>
    %132 = math.tanh %131 : vector<2x32xf32>
    %133 = arith.mulf %128, %132 : vector<2x32xf32>
    %134 = vector.extract_strided_slice %7 {offsets = [0, 2, 0], sizes = [2, 1, 128], strides = [1, 1, 1]} : vector<2x8x256xf32> to vector<2x1x128xf32>
    %135 = vector.shape_cast %134 : vector<2x1x128xf32> to vector<2x128xf32>
    %136 = arith.truncf %108 : vector<2x32xf32> to vector<2x32xbf16>
    %cst_30 = arith.constant dense<0.000000e+00> : vector<2x128xf32>
    %137 = tpu.matmul %136, %8, %cst_30 {dimension_numbers = #tpu.dot_dimension_numbers<[1], [0], [0], [1], [0, 0, 1, 1], [], []>} : vector<2x32xbf16>, vector<32x128xbf16>, vector<2x128xf32> -> vector<2x128xf32>
    %138 = arith.addf %135, %137 : vector<2x128xf32>
    %139 = vector.extract_strided_slice %7 {offsets = [0, 5, 128], sizes = [2, 1, 128], strides = [1, 1, 1]} : vector<2x8x256xf32> to vector<2x1x128xf32>
    %140 = vector.shape_cast %139 : vector<2x1x128xf32> to vector<2x128xf32>
    %141 = arith.truncf %133 : vector<2x32xf32> to vector<2x32xbf16>
    %cst_31 = arith.constant dense<0.000000e+00> : vector<2x128xf32>
    %142 = tpu.matmul %141, %9, %cst_31 {dimension_numbers = #tpu.dot_dimension_numbers<[1], [0], [0], [1], [0, 0, 1, 1], [], []>} : vector<2x32xbf16>, vector<32x128xbf16>, vector<2x128xf32> -> vector<2x128xf32>
    %143 = arith.addf %140, %142 : vector<2x128xf32>
    %144 = vector.extract_strided_slice %138 {offsets = [0, 0], sizes = [2, 32], strides = [1, 1]} : vector<2x128xf32> to vector<2x32xf32>
    %145 = arith.negf %144 : vector<2x32xf32>
    %146 = math.exp %145 : vector<2x32xf32>
    %cst_32 = arith.constant 1.000000e+00 : f32
    %147 = vector.broadcast %cst_32 : f32 to vector<2x32xf32>
    %148 = arith.addf %147, %146 : vector<2x32xf32>
    %149 = arith.divf %147, %148 : vector<2x32xf32>
    %150 = vector.extract_strided_slice %138 {offsets = [0, 32], sizes = [2, 32], strides = [1, 1]} : vector<2x128xf32> to vector<2x32xf32>
    %151 = arith.negf %150 : vector<2x32xf32>
    %152 = math.exp %151 : vector<2x32xf32>
    %cst_33 = arith.constant 1.000000e+00 : f32
    %153 = vector.broadcast %cst_33 : f32 to vector<2x32xf32>
    %154 = arith.addf %153, %152 : vector<2x32xf32>
    %155 = arith.divf %153, %154 : vector<2x32xf32>
    %156 = vector.extract_strided_slice %138 {offsets = [0, 64], sizes = [2, 32], strides = [1, 1]} : vector<2x128xf32> to vector<2x32xf32>
    %157 = math.tanh %156 : vector<2x32xf32>
    %158 = vector.extract_strided_slice %138 {offsets = [0, 96], sizes = [2, 32], strides = [1, 1]} : vector<2x128xf32> to vector<2x32xf32>
    %159 = arith.negf %158 : vector<2x32xf32>
    %160 = math.exp %159 : vector<2x32xf32>
    %cst_34 = arith.constant 1.000000e+00 : f32
    %161 = vector.broadcast %cst_34 : f32 to vector<2x32xf32>
    %162 = arith.addf %161, %160 : vector<2x32xf32>
    %163 = arith.divf %161, %162 : vector<2x32xf32>
    %164 = arith.mulf %155, %106 : vector<2x32xf32>
    %165 = arith.mulf %149, %157 : vector<2x32xf32>
    %166 = arith.addf %164, %165 : vector<2x32xf32>
    %167 = math.tanh %166 : vector<2x32xf32>
    %168 = arith.mulf %163, %167 : vector<2x32xf32>
    %169 = vector.extract_strided_slice %143 {offsets = [0, 0], sizes = [2, 32], strides = [1, 1]} : vector<2x128xf32> to vector<2x32xf32>
    %170 = arith.negf %169 : vector<2x32xf32>
    %171 = math.exp %170 : vector<2x32xf32>
    %cst_35 = arith.constant 1.000000e+00 : f32
    %172 = vector.broadcast %cst_35 : f32 to vector<2x32xf32>
    %173 = arith.addf %172, %171 : vector<2x32xf32>
    %174 = arith.divf %172, %173 : vector<2x32xf32>
    %175 = vector.extract_strided_slice %143 {offsets = [0, 32], sizes = [2, 32], strides = [1, 1]} : vector<2x128xf32> to vector<2x32xf32>
    %176 = arith.negf %175 : vector<2x32xf32>
    %177 = math.exp %176 : vector<2x32xf32>
    %cst_36 = arith.constant 1.000000e+00 : f32
    %178 = vector.broadcast %cst_36 : f32 to vector<2x32xf32>
    %179 = arith.addf %178, %177 : vector<2x32xf32>
    %180 = arith.divf %178, %179 : vector<2x32xf32>
    %181 = vector.extract_strided_slice %143 {offsets = [0, 64], sizes = [2, 32], strides = [1, 1]} : vector<2x128xf32> to vector<2x32xf32>
    %182 = math.tanh %181 : vector<2x32xf32>
    %183 = vector.extract_strided_slice %143 {offsets = [0, 96], sizes = [2, 32], strides = [1, 1]} : vector<2x128xf32> to vector<2x32xf32>
    %184 = arith.negf %183 : vector<2x32xf32>
    %185 = math.exp %184 : vector<2x32xf32>
    %cst_37 = arith.constant 1.000000e+00 : f32
    %186 = vector.broadcast %cst_37 : f32 to vector<2x32xf32>
    %187 = arith.addf %186, %185 : vector<2x32xf32>
    %188 = arith.divf %186, %187 : vector<2x32xf32>
    %189 = arith.mulf %180, %131 : vector<2x32xf32>
    %190 = arith.mulf %174, %182 : vector<2x32xf32>
    %191 = arith.addf %189, %190 : vector<2x32xf32>
    %192 = math.tanh %191 : vector<2x32xf32>
    %193 = arith.mulf %188, %192 : vector<2x32xf32>
    %194 = vector.extract_strided_slice %7 {offsets = [0, 3, 0], sizes = [2, 1, 128], strides = [1, 1, 1]} : vector<2x8x256xf32> to vector<2x1x128xf32>
    %195 = vector.shape_cast %194 : vector<2x1x128xf32> to vector<2x128xf32>
    %196 = arith.truncf %168 : vector<2x32xf32> to vector<2x32xbf16>
    %cst_38 = arith.constant dense<0.000000e+00> : vector<2x128xf32>
    %197 = tpu.matmul %196, %8, %cst_38 {dimension_numbers = #tpu.dot_dimension_numbers<[1], [0], [0], [1], [0, 0, 1, 1], [], []>} : vector<2x32xbf16>, vector<32x128xbf16>, vector<2x128xf32> -> vector<2x128xf32>
    %198 = arith.addf %195, %197 : vector<2x128xf32>
    %199 = vector.extract_strided_slice %7 {offsets = [0, 4, 128], sizes = [2, 1, 128], strides = [1, 1, 1]} : vector<2x8x256xf32> to vector<2x1x128xf32>
    %200 = vector.shape_cast %199 : vector<2x1x128xf32> to vector<2x128xf32>
    %201 = arith.truncf %193 : vector<2x32xf32> to vector<2x32xbf16>
    %cst_39 = arith.constant dense<0.000000e+00> : vector<2x128xf32>
    %202 = tpu.matmul %201, %9, %cst_39 {dimension_numbers = #tpu.dot_dimension_numbers<[1], [0], [0], [1], [0, 0, 1, 1], [], []>} : vector<2x32xbf16>, vector<32x128xbf16>, vector<2x128xf32> -> vector<2x128xf32>
    %203 = arith.addf %200, %202 : vector<2x128xf32>
    %204 = vector.extract_strided_slice %198 {offsets = [0, 0], sizes = [2, 32], strides = [1, 1]} : vector<2x128xf32> to vector<2x32xf32>
    %205 = arith.negf %204 : vector<2x32xf32>
    %206 = math.exp %205 : vector<2x32xf32>
    %cst_40 = arith.constant 1.000000e+00 : f32
    %207 = vector.broadcast %cst_40 : f32 to vector<2x32xf32>
    %208 = arith.addf %207, %206 : vector<2x32xf32>
    %209 = arith.divf %207, %208 : vector<2x32xf32>
    %210 = vector.extract_strided_slice %198 {offsets = [0, 32], sizes = [2, 32], strides = [1, 1]} : vector<2x128xf32> to vector<2x32xf32>
    %211 = arith.negf %210 : vector<2x32xf32>
    %212 = math.exp %211 : vector<2x32xf32>
    %cst_41 = arith.constant 1.000000e+00 : f32
    %213 = vector.broadcast %cst_41 : f32 to vector<2x32xf32>
    %214 = arith.addf %213, %212 : vector<2x32xf32>
    %215 = arith.divf %213, %214 : vector<2x32xf32>
    %216 = vector.extract_strided_slice %198 {offsets = [0, 64], sizes = [2, 32], strides = [1, 1]} : vector<2x128xf32> to vector<2x32xf32>
    %217 = math.tanh %216 : vector<2x32xf32>
    %218 = vector.extract_strided_slice %198 {offsets = [0, 96], sizes = [2, 32], strides = [1, 1]} : vector<2x128xf32> to vector<2x32xf32>
    %219 = arith.negf %218 : vector<2x32xf32>
    %220 = math.exp %219 : vector<2x32xf32>
    %cst_42 = arith.constant 1.000000e+00 : f32
    %221 = vector.broadcast %cst_42 : f32 to vector<2x32xf32>
    %222 = arith.addf %221, %220 : vector<2x32xf32>
    %223 = arith.divf %221, %222 : vector<2x32xf32>
    %224 = arith.mulf %215, %166 : vector<2x32xf32>
    %225 = arith.mulf %209, %217 : vector<2x32xf32>
    %226 = arith.addf %224, %225 : vector<2x32xf32>
    %227 = math.tanh %226 : vector<2x32xf32>
    %228 = arith.mulf %223, %227 : vector<2x32xf32>
    %229 = vector.extract_strided_slice %203 {offsets = [0, 0], sizes = [2, 32], strides = [1, 1]} : vector<2x128xf32> to vector<2x32xf32>
    %230 = arith.negf %229 : vector<2x32xf32>
    %231 = math.exp %230 : vector<2x32xf32>
    %cst_43 = arith.constant 1.000000e+00 : f32
    %232 = vector.broadcast %cst_43 : f32 to vector<2x32xf32>
    %233 = arith.addf %232, %231 : vector<2x32xf32>
    %234 = arith.divf %232, %233 : vector<2x32xf32>
    %235 = vector.extract_strided_slice %203 {offsets = [0, 32], sizes = [2, 32], strides = [1, 1]} : vector<2x128xf32> to vector<2x32xf32>
    %236 = arith.negf %235 : vector<2x32xf32>
    %237 = math.exp %236 : vector<2x32xf32>
    %cst_44 = arith.constant 1.000000e+00 : f32
    %238 = vector.broadcast %cst_44 : f32 to vector<2x32xf32>
    %239 = arith.addf %238, %237 : vector<2x32xf32>
    %240 = arith.divf %238, %239 : vector<2x32xf32>
    %241 = vector.extract_strided_slice %203 {offsets = [0, 64], sizes = [2, 32], strides = [1, 1]} : vector<2x128xf32> to vector<2x32xf32>
    %242 = math.tanh %241 : vector<2x32xf32>
    %243 = vector.extract_strided_slice %203 {offsets = [0, 96], sizes = [2, 32], strides = [1, 1]} : vector<2x128xf32> to vector<2x32xf32>
    %244 = arith.negf %243 : vector<2x32xf32>
    %245 = math.exp %244 : vector<2x32xf32>
    %cst_45 = arith.constant 1.000000e+00 : f32
    %246 = vector.broadcast %cst_45 : f32 to vector<2x32xf32>
    %247 = arith.addf %246, %245 : vector<2x32xf32>
    %248 = arith.divf %246, %247 : vector<2x32xf32>
    %249 = arith.mulf %240, %191 : vector<2x32xf32>
    %250 = arith.mulf %234, %242 : vector<2x32xf32>
    %251 = arith.addf %249, %250 : vector<2x32xf32>
    %252 = math.tanh %251 : vector<2x32xf32>
    %253 = arith.mulf %248, %252 : vector<2x32xf32>
    %254 = vector.extract_strided_slice %7 {offsets = [0, 4, 0], sizes = [2, 1, 128], strides = [1, 1, 1]} : vector<2x8x256xf32> to vector<2x1x128xf32>
    %255 = vector.shape_cast %254 : vector<2x1x128xf32> to vector<2x128xf32>
    %256 = arith.truncf %228 : vector<2x32xf32> to vector<2x32xbf16>
    %cst_46 = arith.constant dense<0.000000e+00> : vector<2x128xf32>
    %257 = tpu.matmul %256, %8, %cst_46 {dimension_numbers = #tpu.dot_dimension_numbers<[1], [0], [0], [1], [0, 0, 1, 1], [], []>} : vector<2x32xbf16>, vector<32x128xbf16>, vector<2x128xf32> -> vector<2x128xf32>
    %258 = arith.addf %255, %257 : vector<2x128xf32>
    %259 = vector.extract_strided_slice %7 {offsets = [0, 3, 128], sizes = [2, 1, 128], strides = [1, 1, 1]} : vector<2x8x256xf32> to vector<2x1x128xf32>
    %260 = vector.shape_cast %259 : vector<2x1x128xf32> to vector<2x128xf32>
    %261 = arith.truncf %253 : vector<2x32xf32> to vector<2x32xbf16>
    %cst_47 = arith.constant dense<0.000000e+00> : vector<2x128xf32>
    %262 = tpu.matmul %261, %9, %cst_47 {dimension_numbers = #tpu.dot_dimension_numbers<[1], [0], [0], [1], [0, 0, 1, 1], [], []>} : vector<2x32xbf16>, vector<32x128xbf16>, vector<2x128xf32> -> vector<2x128xf32>
    %263 = arith.addf %260, %262 : vector<2x128xf32>
    %264 = vector.extract_strided_slice %258 {offsets = [0, 0], sizes = [2, 32], strides = [1, 1]} : vector<2x128xf32> to vector<2x32xf32>
    %265 = arith.negf %264 : vector<2x32xf32>
    %266 = math.exp %265 : vector<2x32xf32>
    %cst_48 = arith.constant 1.000000e+00 : f32
    %267 = vector.broadcast %cst_48 : f32 to vector<2x32xf32>
    %268 = arith.addf %267, %266 : vector<2x32xf32>
    %269 = arith.divf %267, %268 : vector<2x32xf32>
    %270 = vector.extract_strided_slice %258 {offsets = [0, 32], sizes = [2, 32], strides = [1, 1]} : vector<2x128xf32> to vector<2x32xf32>
    %271 = arith.negf %270 : vector<2x32xf32>
    %272 = math.exp %271 : vector<2x32xf32>
    %cst_49 = arith.constant 1.000000e+00 : f32
    %273 = vector.broadcast %cst_49 : f32 to vector<2x32xf32>
    %274 = arith.addf %273, %272 : vector<2x32xf32>
    %275 = arith.divf %273, %274 : vector<2x32xf32>
    %276 = vector.extract_strided_slice %258 {offsets = [0, 64], sizes = [2, 32], strides = [1, 1]} : vector<2x128xf32> to vector<2x32xf32>
    %277 = math.tanh %276 : vector<2x32xf32>
    %278 = vector.extract_strided_slice %258 {offsets = [0, 96], sizes = [2, 32], strides = [1, 1]} : vector<2x128xf32> to vector<2x32xf32>
    %279 = arith.negf %278 : vector<2x32xf32>
    %280 = math.exp %279 : vector<2x32xf32>
    %cst_50 = arith.constant 1.000000e+00 : f32
    %281 = vector.broadcast %cst_50 : f32 to vector<2x32xf32>
    %282 = arith.addf %281, %280 : vector<2x32xf32>
    %283 = arith.divf %281, %282 : vector<2x32xf32>
    %284 = arith.mulf %275, %226 : vector<2x32xf32>
    %285 = arith.mulf %269, %277 : vector<2x32xf32>
    %286 = arith.addf %284, %285 : vector<2x32xf32>
    %287 = math.tanh %286 : vector<2x32xf32>
    %288 = arith.mulf %283, %287 : vector<2x32xf32>
    %289 = vector.extract_strided_slice %263 {offsets = [0, 0], sizes = [2, 32], strides = [1, 1]} : vector<2x128xf32> to vector<2x32xf32>
    %290 = arith.negf %289 : vector<2x32xf32>
    %291 = math.exp %290 : vector<2x32xf32>
    %cst_51 = arith.constant 1.000000e+00 : f32
    %292 = vector.broadcast %cst_51 : f32 to vector<2x32xf32>
    %293 = arith.addf %292, %291 : vector<2x32xf32>
    %294 = arith.divf %292, %293 : vector<2x32xf32>
    %295 = vector.extract_strided_slice %263 {offsets = [0, 32], sizes = [2, 32], strides = [1, 1]} : vector<2x128xf32> to vector<2x32xf32>
    %296 = arith.negf %295 : vector<2x32xf32>
    %297 = math.exp %296 : vector<2x32xf32>
    %cst_52 = arith.constant 1.000000e+00 : f32
    %298 = vector.broadcast %cst_52 : f32 to vector<2x32xf32>
    %299 = arith.addf %298, %297 : vector<2x32xf32>
    %300 = arith.divf %298, %299 : vector<2x32xf32>
    %301 = vector.extract_strided_slice %263 {offsets = [0, 64], sizes = [2, 32], strides = [1, 1]} : vector<2x128xf32> to vector<2x32xf32>
    %302 = math.tanh %301 : vector<2x32xf32>
    %303 = vector.extract_strided_slice %263 {offsets = [0, 96], sizes = [2, 32], strides = [1, 1]} : vector<2x128xf32> to vector<2x32xf32>
    %304 = arith.negf %303 : vector<2x32xf32>
    %305 = math.exp %304 : vector<2x32xf32>
    %cst_53 = arith.constant 1.000000e+00 : f32
    %306 = vector.broadcast %cst_53 : f32 to vector<2x32xf32>
    %307 = arith.addf %306, %305 : vector<2x32xf32>
    %308 = arith.divf %306, %307 : vector<2x32xf32>
    %309 = arith.mulf %300, %251 : vector<2x32xf32>
    %310 = arith.mulf %294, %302 : vector<2x32xf32>
    %311 = arith.addf %309, %310 : vector<2x32xf32>
    %312 = math.tanh %311 : vector<2x32xf32>
    %313 = arith.mulf %308, %312 : vector<2x32xf32>
    %314 = vector.extract_strided_slice %7 {offsets = [0, 5, 0], sizes = [2, 1, 128], strides = [1, 1, 1]} : vector<2x8x256xf32> to vector<2x1x128xf32>
    %315 = vector.shape_cast %314 : vector<2x1x128xf32> to vector<2x128xf32>
    %316 = arith.truncf %288 : vector<2x32xf32> to vector<2x32xbf16>
    %cst_54 = arith.constant dense<0.000000e+00> : vector<2x128xf32>
    %317 = tpu.matmul %316, %8, %cst_54 {dimension_numbers = #tpu.dot_dimension_numbers<[1], [0], [0], [1], [0, 0, 1, 1], [], []>} : vector<2x32xbf16>, vector<32x128xbf16>, vector<2x128xf32> -> vector<2x128xf32>
    %318 = arith.addf %315, %317 : vector<2x128xf32>
    %319 = vector.extract_strided_slice %7 {offsets = [0, 2, 128], sizes = [2, 1, 128], strides = [1, 1, 1]} : vector<2x8x256xf32> to vector<2x1x128xf32>
    %320 = vector.shape_cast %319 : vector<2x1x128xf32> to vector<2x128xf32>
    %321 = arith.truncf %313 : vector<2x32xf32> to vector<2x32xbf16>
    %cst_55 = arith.constant dense<0.000000e+00> : vector<2x128xf32>
    %322 = tpu.matmul %321, %9, %cst_55 {dimension_numbers = #tpu.dot_dimension_numbers<[1], [0], [0], [1], [0, 0, 1, 1], [], []>} : vector<2x32xbf16>, vector<32x128xbf16>, vector<2x128xf32> -> vector<2x128xf32>
    %323 = arith.addf %320, %322 : vector<2x128xf32>
    %324 = vector.extract_strided_slice %318 {offsets = [0, 0], sizes = [2, 32], strides = [1, 1]} : vector<2x128xf32> to vector<2x32xf32>
    %325 = arith.negf %324 : vector<2x32xf32>
    %326 = math.exp %325 : vector<2x32xf32>
    %cst_56 = arith.constant 1.000000e+00 : f32
    %327 = vector.broadcast %cst_56 : f32 to vector<2x32xf32>
    %328 = arith.addf %327, %326 : vector<2x32xf32>
    %329 = arith.divf %327, %328 : vector<2x32xf32>
    %330 = vector.extract_strided_slice %318 {offsets = [0, 32], sizes = [2, 32], strides = [1, 1]} : vector<2x128xf32> to vector<2x32xf32>
    %331 = arith.negf %330 : vector<2x32xf32>
    %332 = math.exp %331 : vector<2x32xf32>
    %cst_57 = arith.constant 1.000000e+00 : f32
    %333 = vector.broadcast %cst_57 : f32 to vector<2x32xf32>
    %334 = arith.addf %333, %332 : vector<2x32xf32>
    %335 = arith.divf %333, %334 : vector<2x32xf32>
    %336 = vector.extract_strided_slice %318 {offsets = [0, 64], sizes = [2, 32], strides = [1, 1]} : vector<2x128xf32> to vector<2x32xf32>
    %337 = math.tanh %336 : vector<2x32xf32>
    %338 = vector.extract_strided_slice %318 {offsets = [0, 96], sizes = [2, 32], strides = [1, 1]} : vector<2x128xf32> to vector<2x32xf32>
    %339 = arith.negf %338 : vector<2x32xf32>
    %340 = math.exp %339 : vector<2x32xf32>
    %cst_58 = arith.constant 1.000000e+00 : f32
    %341 = vector.broadcast %cst_58 : f32 to vector<2x32xf32>
    %342 = arith.addf %341, %340 : vector<2x32xf32>
    %343 = arith.divf %341, %342 : vector<2x32xf32>
    %344 = arith.mulf %335, %286 : vector<2x32xf32>
    %345 = arith.mulf %329, %337 : vector<2x32xf32>
    %346 = arith.addf %344, %345 : vector<2x32xf32>
    %347 = math.tanh %346 : vector<2x32xf32>
    %348 = arith.mulf %343, %347 : vector<2x32xf32>
    %349 = vector.extract_strided_slice %323 {offsets = [0, 0], sizes = [2, 32], strides = [1, 1]} : vector<2x128xf32> to vector<2x32xf32>
    %350 = arith.negf %349 : vector<2x32xf32>
    %351 = math.exp %350 : vector<2x32xf32>
    %cst_59 = arith.constant 1.000000e+00 : f32
    %352 = vector.broadcast %cst_59 : f32 to vector<2x32xf32>
    %353 = arith.addf %352, %351 : vector<2x32xf32>
    %354 = arith.divf %352, %353 : vector<2x32xf32>
    %355 = vector.extract_strided_slice %323 {offsets = [0, 32], sizes = [2, 32], strides = [1, 1]} : vector<2x128xf32> to vector<2x32xf32>
    %356 = arith.negf %355 : vector<2x32xf32>
    %357 = math.exp %356 : vector<2x32xf32>
    %cst_60 = arith.constant 1.000000e+00 : f32
    %358 = vector.broadcast %cst_60 : f32 to vector<2x32xf32>
    %359 = arith.addf %358, %357 : vector<2x32xf32>
    %360 = arith.divf %358, %359 : vector<2x32xf32>
    %361 = vector.extract_strided_slice %323 {offsets = [0, 64], sizes = [2, 32], strides = [1, 1]} : vector<2x128xf32> to vector<2x32xf32>
    %362 = math.tanh %361 : vector<2x32xf32>
    %363 = vector.extract_strided_slice %323 {offsets = [0, 96], sizes = [2, 32], strides = [1, 1]} : vector<2x128xf32> to vector<2x32xf32>
    %364 = arith.negf %363 : vector<2x32xf32>
    %365 = math.exp %364 : vector<2x32xf32>
    %cst_61 = arith.constant 1.000000e+00 : f32
    %366 = vector.broadcast %cst_61 : f32 to vector<2x32xf32>
    %367 = arith.addf %366, %365 : vector<2x32xf32>
    %368 = arith.divf %366, %367 : vector<2x32xf32>
    %369 = arith.mulf %360, %311 : vector<2x32xf32>
    %370 = arith.mulf %354, %362 : vector<2x32xf32>
    %371 = arith.addf %369, %370 : vector<2x32xf32>
    %372 = math.tanh %371 : vector<2x32xf32>
    %373 = arith.mulf %368, %372 : vector<2x32xf32>
    %374 = vector.extract_strided_slice %7 {offsets = [0, 6, 0], sizes = [2, 1, 128], strides = [1, 1, 1]} : vector<2x8x256xf32> to vector<2x1x128xf32>
    %375 = vector.shape_cast %374 : vector<2x1x128xf32> to vector<2x128xf32>
    %376 = arith.truncf %348 : vector<2x32xf32> to vector<2x32xbf16>
    %cst_62 = arith.constant dense<0.000000e+00> : vector<2x128xf32>
    %377 = tpu.matmul %376, %8, %cst_62 {dimension_numbers = #tpu.dot_dimension_numbers<[1], [0], [0], [1], [0, 0, 1, 1], [], []>} : vector<2x32xbf16>, vector<32x128xbf16>, vector<2x128xf32> -> vector<2x128xf32>
    %378 = arith.addf %375, %377 : vector<2x128xf32>
    %379 = vector.extract_strided_slice %7 {offsets = [0, 1, 128], sizes = [2, 1, 128], strides = [1, 1, 1]} : vector<2x8x256xf32> to vector<2x1x128xf32>
    %380 = vector.shape_cast %379 : vector<2x1x128xf32> to vector<2x128xf32>
    %381 = arith.truncf %373 : vector<2x32xf32> to vector<2x32xbf16>
    %cst_63 = arith.constant dense<0.000000e+00> : vector<2x128xf32>
    %382 = tpu.matmul %381, %9, %cst_63 {dimension_numbers = #tpu.dot_dimension_numbers<[1], [0], [0], [1], [0, 0, 1, 1], [], []>} : vector<2x32xbf16>, vector<32x128xbf16>, vector<2x128xf32> -> vector<2x128xf32>
    %383 = arith.addf %380, %382 : vector<2x128xf32>
    %384 = vector.extract_strided_slice %378 {offsets = [0, 0], sizes = [2, 32], strides = [1, 1]} : vector<2x128xf32> to vector<2x32xf32>
    %385 = arith.negf %384 : vector<2x32xf32>
    %386 = math.exp %385 : vector<2x32xf32>
    %cst_64 = arith.constant 1.000000e+00 : f32
    %387 = vector.broadcast %cst_64 : f32 to vector<2x32xf32>
    %388 = arith.addf %387, %386 : vector<2x32xf32>
    %389 = arith.divf %387, %388 : vector<2x32xf32>
    %390 = vector.extract_strided_slice %378 {offsets = [0, 32], sizes = [2, 32], strides = [1, 1]} : vector<2x128xf32> to vector<2x32xf32>
    %391 = arith.negf %390 : vector<2x32xf32>
    %392 = math.exp %391 : vector<2x32xf32>
    %cst_65 = arith.constant 1.000000e+00 : f32
    %393 = vector.broadcast %cst_65 : f32 to vector<2x32xf32>
    %394 = arith.addf %393, %392 : vector<2x32xf32>
    %395 = arith.divf %393, %394 : vector<2x32xf32>
    %396 = vector.extract_strided_slice %378 {offsets = [0, 64], sizes = [2, 32], strides = [1, 1]} : vector<2x128xf32> to vector<2x32xf32>
    %397 = math.tanh %396 : vector<2x32xf32>
    %398 = vector.extract_strided_slice %378 {offsets = [0, 96], sizes = [2, 32], strides = [1, 1]} : vector<2x128xf32> to vector<2x32xf32>
    %399 = arith.negf %398 : vector<2x32xf32>
    %400 = math.exp %399 : vector<2x32xf32>
    %cst_66 = arith.constant 1.000000e+00 : f32
    %401 = vector.broadcast %cst_66 : f32 to vector<2x32xf32>
    %402 = arith.addf %401, %400 : vector<2x32xf32>
    %403 = arith.divf %401, %402 : vector<2x32xf32>
    %404 = arith.mulf %395, %346 : vector<2x32xf32>
    %405 = arith.mulf %389, %397 : vector<2x32xf32>
    %406 = arith.addf %404, %405 : vector<2x32xf32>
    %407 = math.tanh %406 : vector<2x32xf32>
    %408 = arith.mulf %403, %407 : vector<2x32xf32>
    %409 = vector.extract_strided_slice %383 {offsets = [0, 0], sizes = [2, 32], strides = [1, 1]} : vector<2x128xf32> to vector<2x32xf32>
    %410 = arith.negf %409 : vector<2x32xf32>
    %411 = math.exp %410 : vector<2x32xf32>
    %cst_67 = arith.constant 1.000000e+00 : f32
    %412 = vector.broadcast %cst_67 : f32 to vector<2x32xf32>
    %413 = arith.addf %412, %411 : vector<2x32xf32>
    %414 = arith.divf %412, %413 : vector<2x32xf32>
    %415 = vector.extract_strided_slice %383 {offsets = [0, 32], sizes = [2, 32], strides = [1, 1]} : vector<2x128xf32> to vector<2x32xf32>
    %416 = arith.negf %415 : vector<2x32xf32>
    %417 = math.exp %416 : vector<2x32xf32>
    %cst_68 = arith.constant 1.000000e+00 : f32
    %418 = vector.broadcast %cst_68 : f32 to vector<2x32xf32>
    %419 = arith.addf %418, %417 : vector<2x32xf32>
    %420 = arith.divf %418, %419 : vector<2x32xf32>
    %421 = vector.extract_strided_slice %383 {offsets = [0, 64], sizes = [2, 32], strides = [1, 1]} : vector<2x128xf32> to vector<2x32xf32>
    %422 = math.tanh %421 : vector<2x32xf32>
    %423 = vector.extract_strided_slice %383 {offsets = [0, 96], sizes = [2, 32], strides = [1, 1]} : vector<2x128xf32> to vector<2x32xf32>
    %424 = arith.negf %423 : vector<2x32xf32>
    %425 = math.exp %424 : vector<2x32xf32>
    %cst_69 = arith.constant 1.000000e+00 : f32
    %426 = vector.broadcast %cst_69 : f32 to vector<2x32xf32>
    %427 = arith.addf %426, %425 : vector<2x32xf32>
    %428 = arith.divf %426, %427 : vector<2x32xf32>
    %429 = arith.mulf %420, %371 : vector<2x32xf32>
    %430 = arith.mulf %414, %422 : vector<2x32xf32>
    %431 = arith.addf %429, %430 : vector<2x32xf32>
    %432 = math.tanh %431 : vector<2x32xf32>
    %433 = arith.mulf %428, %432 : vector<2x32xf32>
    %434 = vector.extract_strided_slice %7 {offsets = [0, 7, 0], sizes = [2, 1, 128], strides = [1, 1, 1]} : vector<2x8x256xf32> to vector<2x1x128xf32>
    %435 = vector.shape_cast %434 : vector<2x1x128xf32> to vector<2x128xf32>
    %436 = arith.truncf %408 : vector<2x32xf32> to vector<2x32xbf16>
    %cst_70 = arith.constant dense<0.000000e+00> : vector<2x128xf32>
    %437 = tpu.matmul %436, %8, %cst_70 {dimension_numbers = #tpu.dot_dimension_numbers<[1], [0], [0], [1], [0, 0, 1, 1], [], []>} : vector<2x32xbf16>, vector<32x128xbf16>, vector<2x128xf32> -> vector<2x128xf32>
    %438 = arith.addf %435, %437 : vector<2x128xf32>
    %439 = vector.extract_strided_slice %7 {offsets = [0, 0, 128], sizes = [2, 1, 128], strides = [1, 1, 1]} : vector<2x8x256xf32> to vector<2x1x128xf32>
    %440 = vector.shape_cast %439 : vector<2x1x128xf32> to vector<2x128xf32>
    %441 = arith.truncf %433 : vector<2x32xf32> to vector<2x32xbf16>
    %cst_71 = arith.constant dense<0.000000e+00> : vector<2x128xf32>
    %442 = tpu.matmul %441, %9, %cst_71 {dimension_numbers = #tpu.dot_dimension_numbers<[1], [0], [0], [1], [0, 0, 1, 1], [], []>} : vector<2x32xbf16>, vector<32x128xbf16>, vector<2x128xf32> -> vector<2x128xf32>
    %443 = arith.addf %440, %442 : vector<2x128xf32>
    %444 = vector.extract_strided_slice %438 {offsets = [0, 0], sizes = [2, 32], strides = [1, 1]} : vector<2x128xf32> to vector<2x32xf32>
    %445 = arith.negf %444 : vector<2x32xf32>
    %446 = math.exp %445 : vector<2x32xf32>
    %cst_72 = arith.constant 1.000000e+00 : f32
    %447 = vector.broadcast %cst_72 : f32 to vector<2x32xf32>
    %448 = arith.addf %447, %446 : vector<2x32xf32>
    %449 = arith.divf %447, %448 : vector<2x32xf32>
    %450 = vector.extract_strided_slice %438 {offsets = [0, 32], sizes = [2, 32], strides = [1, 1]} : vector<2x128xf32> to vector<2x32xf32>
    %451 = arith.negf %450 : vector<2x32xf32>
    %452 = math.exp %451 : vector<2x32xf32>
    %cst_73 = arith.constant 1.000000e+00 : f32
    %453 = vector.broadcast %cst_73 : f32 to vector<2x32xf32>
    %454 = arith.addf %453, %452 : vector<2x32xf32>
    %455 = arith.divf %453, %454 : vector<2x32xf32>
    %456 = vector.extract_strided_slice %438 {offsets = [0, 64], sizes = [2, 32], strides = [1, 1]} : vector<2x128xf32> to vector<2x32xf32>
    %457 = math.tanh %456 : vector<2x32xf32>
    %458 = vector.extract_strided_slice %438 {offsets = [0, 96], sizes = [2, 32], strides = [1, 1]} : vector<2x128xf32> to vector<2x32xf32>
    %459 = arith.negf %458 : vector<2x32xf32>
    %460 = math.exp %459 : vector<2x32xf32>
    %cst_74 = arith.constant 1.000000e+00 : f32
    %461 = vector.broadcast %cst_74 : f32 to vector<2x32xf32>
    %462 = arith.addf %461, %460 : vector<2x32xf32>
    %463 = arith.divf %461, %462 : vector<2x32xf32>
    %464 = arith.mulf %455, %406 : vector<2x32xf32>
    %465 = arith.mulf %449, %457 : vector<2x32xf32>
    %466 = arith.addf %464, %465 : vector<2x32xf32>
    %467 = math.tanh %466 : vector<2x32xf32>
    %468 = arith.mulf %463, %467 : vector<2x32xf32>
    %469 = vector.extract_strided_slice %443 {offsets = [0, 0], sizes = [2, 32], strides = [1, 1]} : vector<2x128xf32> to vector<2x32xf32>
    %470 = arith.negf %469 : vector<2x32xf32>
    %471 = math.exp %470 : vector<2x32xf32>
    %cst_75 = arith.constant 1.000000e+00 : f32
    %472 = vector.broadcast %cst_75 : f32 to vector<2x32xf32>
    %473 = arith.addf %472, %471 : vector<2x32xf32>
    %474 = arith.divf %472, %473 : vector<2x32xf32>
    %475 = vector.extract_strided_slice %443 {offsets = [0, 32], sizes = [2, 32], strides = [1, 1]} : vector<2x128xf32> to vector<2x32xf32>
    %476 = arith.negf %475 : vector<2x32xf32>
    %477 = math.exp %476 : vector<2x32xf32>
    %cst_76 = arith.constant 1.000000e+00 : f32
    %478 = vector.broadcast %cst_76 : f32 to vector<2x32xf32>
    %479 = arith.addf %478, %477 : vector<2x32xf32>
    %480 = arith.divf %478, %479 : vector<2x32xf32>
    %481 = vector.extract_strided_slice %443 {offsets = [0, 64], sizes = [2, 32], strides = [1, 1]} : vector<2x128xf32> to vector<2x32xf32>
    %482 = math.tanh %481 : vector<2x32xf32>
    %483 = vector.extract_strided_slice %443 {offsets = [0, 96], sizes = [2, 32], strides = [1, 1]} : vector<2x128xf32> to vector<2x32xf32>
    %484 = arith.negf %483 : vector<2x32xf32>
    %485 = math.exp %484 : vector<2x32xf32>
    %cst_77 = arith.constant 1.000000e+00 : f32
    %486 = vector.broadcast %cst_77 : f32 to vector<2x32xf32>
    %487 = arith.addf %486, %485 : vector<2x32xf32>
    %488 = arith.divf %486, %487 : vector<2x32xf32>
    %489 = arith.mulf %480, %431 : vector<2x32xf32>
    %490 = arith.mulf %474, %482 : vector<2x32xf32>
    %491 = arith.addf %489, %490 : vector<2x32xf32>
    %492 = math.tanh %491 : vector<2x32xf32>
    %493 = arith.mulf %488, %492 : vector<2x32xf32>
    %494 = tpu.concatenate %468, %493 in 1 : vector<2x32xf32>, vector<2x32xf32> -> vector<2x64xf32>
    %495 = arith.truncf %494 : vector<2x64xf32> to vector<2x64xbf16>
    %c0_78 = arith.constant 0 : index
    %c0_79 = arith.constant 0 : index
    %496 = vector.load %arg5[%c0_78, %c0_79] : memref<64x8xbf16, #tpu.memory_space<vmem>>, vector<64x8xbf16>
    %cst_80 = arith.constant dense<0.000000e+00> : vector<2x8xf32>
    %497 = tpu.matmul %495, %496, %cst_80 {dimension_numbers = #tpu.dot_dimension_numbers<[1], [0], [0], [1], [0, 0, 1, 1], [], []>} : vector<2x64xbf16>, vector<64x8xbf16>, vector<2x8xf32> -> vector<2x8xf32>
    %c0_81 = arith.constant 0 : index
    %c0_82 = arith.constant 0 : index
    %498 = vector.load %arg6[%c0_81, %c0_82] : memref<1x8xf32, #tpu.memory_space<vmem>>, vector<1x8xf32>
    %499 = vector.broadcast %498 : vector<1x8xf32> to vector<2x8xf32>
    %500 = arith.addf %497, %499 : vector<2x8xf32>
    %c0_83 = arith.constant 0 : index
    %c0_84 = arith.constant 0 : index
    %501 = vector.load %arg7[%c0_83, %c0_84] : memref<2x8xf32, #tpu.memory_space<vmem>>, vector<2x8xf32>
    tpu.vector_store %arg7[%c0_83, %c0_84], %500 {strides = array<i32>} : memref<2x8xf32, #tpu.memory_space<vmem>>, vector<2x8xf32>,
    return
  }
}

</mosaic_0001>

<llo_original>
// kernel: tpu_custom_call.1
$region0: #{tpu_custom_call.1}
  #allocation0 [shape = 'u32[]', space=smem, size = 0x4, offset = 0x4, fixed_abs, tag = 'smem constant byte address 0x4 - core index']
  #allocation1 [shape = 'u32[72,128]{1,0:T(1,128)}', space=vmem, size = 0x9000, scoped, tag = 'internal scratch']
  %s0 = inlined_call_operand.hbm [shape: bf16[2,8,16], index: 0, kind: input, shape index: {}]
  %s1 = inlined_call_operand.vmem [shape: bf16[16,256], index: 1, kind: input, shape index: {}]
  %s2 = inlined_call_operand.vmem [shape: bf16[32,128], index: 2, kind: input, shape index: {}]
  %s3 = inlined_call_operand.hbm [shape: bf16[32,128], index: 3, kind: input, shape index: {}]
  %s4 = inlined_call_operand.vmem [shape: f32[1,256], index: 4, kind: input, shape index: {}]
  %s5 = inlined_call_operand.vmem [shape: bf16[64,8], index: 5, kind: input, shape index: {}]
  %s6 = inlined_call_operand.vmem [shape: f32[1,8], index: 6, kind: input, shape index: {}]
  %s7 = inlined_call_operand.hbm [shape: f32[2,8], index: 7, kind: output, shape index: {}]
  %s8 = sld [smem:[#allocation0]]
  $region46: #{tpu_custom_call.1} parent=0
    _
  %s10 = ssub.s32 1, %s8
  %s11 = scalar_select 0, %s10, %s8
  $region1: #{tpu_custom_call.1} parent=0
    #allocation2 [shape = 'u8[4096]{0}', space=vmem, size = 0x1000, scoped, tag = 'input window, operand 0, single buffered']
    #allocation3 [shape = 's32[1]{0}', space=sflag, size = 0x4, scoped, tag = 'scoped memory for tpu_custom_call.1']
    #allocation4 [shape = 's32[1]{0}', space=sflag, size = 0x4, scoped, tag = 'scoped memory for tpu_custom_call.1']
    #allocation5 [shape = 'u8[8192]{0}', space=vmem, size = 0x2000, scoped, tag = 'input window, operand 3, single buffered']
    #allocation6 [shape = 's32[1]{0}', space=sflag, size = 0x4, scoped, tag = 'scoped memory for tpu_custom_call.1']
    #allocation7 [shape = 'u8[1024]{0}', space=vmem, size = 0x400, scoped, tag = 'output window, operand 0, single buffered']
    %12 = vsyncpa [#allocation3], 0
    %13 = vsyncpa [#allocation6], 0
    %14 = vsyncpa [#allocation4], 0
    // Predicated region
    $region2: #{tpu_custom_call.1} parent=1 // pred_check
      _
    $region3: #{tpu_custom_call.1} parent=1 // pred_check_branch
      %16 = sbr.rel (0) target = $region5
    $region4: #{tpu_custom_call.1} parent=1 // pred_region
      %18 = vsyncadd [#allocation3], 0
      %s19 = sshll.u32 %s0, 4
      %s20 = int_to_ptr.hbm [resolvable:$true] %s19
      %s21 = sshll.u32 [#allocation2], 4
      %s22 = int_to_ptr.vmem [resolvable:$true] %s21
      %27 = dma.hbm_to_vmem [thread:$0]  %s20, 128, %s22, [#allocation3], 64, 64, 4
    $region5: #{tpu_custom_call.1} parent=1 // pred_fallthru
      _
    // Predicated region
    $region6: #{tpu_custom_call.1} parent=1 // pred_check
      _
    $region7: #{tpu_custom_call.1} parent=1 // pred_check_branch
      %29 = sbr.rel (0) target = $region9
    $region8: #{tpu_custom_call.1} parent=1 // pred_region
      _
    $region9: #{tpu_custom_call.1} parent=1 // pred_fallthru
      _
    // Predicated region
    $region10: #{tpu_custom_call.1} parent=1 // pred_check
      _
    $region11: #{tpu_custom_call.1} parent=1 // pred_check_branch
      %31 = sbr.rel (0) target = $region13
    $region12: #{tpu_custom_call.1} parent=1 // pred_region
      _
    $region13: #{tpu_custom_call.1} parent=1 // pred_fallthru
      _
    // Predicated region
    $region14: #{tpu_custom_call.1} parent=1 // pred_check
      _
    $region15: #{tpu_custom_call.1} parent=1 // pred_check_branch
      %33 = sbr.rel (0) target = $region17
    $region16: #{tpu_custom_call.1} parent=1 // pred_region
      %35 = vsyncadd [#allocation6], 0
      %s36 = sshll.u32 %s3, 4
      %s37 = int_to_ptr.hbm [resolvable:$true] %s36
      %s38 = sshll.u32 [#allocation5], 4
      %s39 = int_to_ptr.vmem [resolvable:$true] %s38
      %44 = dma.hbm_to_vmem [thread:$0]  %s37, 256, %s39, [#allocation6], 64, 64, 4
    $region17: #{tpu_custom_call.1} parent=1 // pred_fallthru
      _
    // Predicated region
    $region18: #{tpu_custom_call.1} parent=1 // pred_check
      _
    $region19: #{tpu_custom_call.1} parent=1 // pred_check_branch
      %46 = sbr.rel (0) target = $region21
    $region20: #{tpu_custom_call.1} parent=1 // pred_region
      _
    $region21: #{tpu_custom_call.1} parent=1 // pred_fallthru
      _
    // Predicated region
    $region22: #{tpu_custom_call.1} parent=1 // pred_check
      _
    $region23: #{tpu_custom_call.1} parent=1 // pred_check_branch
      %48 = sbr.rel (0) target = $region25
    $region24: #{tpu_custom_call.1} parent=1 // pred_region
      _
    $region25: #{tpu_custom_call.1} parent=1 // pred_fallthru
      _
    // Predicated region
    $region26: #{tpu_custom_call.1} parent=1 // pred_check
      _
    $region27: #{tpu_custom_call.1} parent=1 // pred_check_branch
      %50 = sbr.rel (0) target = $region29
    $region28: #{tpu_custom_call.1} parent=1 // pred_region
      _
    $region29: #{tpu_custom_call.1} parent=1 // pred_fallthru
      _
    // Predicated region
    $region30: #{tpu_custom_call.1} parent=1 // pred_check
      _
    $region31: #{tpu_custom_call.1} parent=1 // pred_check_branch
      %52 = sbr.rel (0) target = $region33
    $region32: #{tpu_custom_call.1} parent=1 // pred_region
      %54 = dma.done [#allocation3], 128
    $region33: #{tpu_custom_call.1} parent=1 // pred_fallthru
      _
    // Predicated region
    $region34: #{tpu_custom_call.1} parent=1 // pred_check
      _
    $region35: #{tpu_custom_call.1} parent=1 // pred_check_branch
      %56 = sbr.rel (0) target = $region37
    $region36: #{tpu_custom_call.1} parent=1 // pred_region
      %58 = dma.done [#allocation6], 256
    $region37: #{tpu_custom_call.1} parent=1 // pred_fallthru
      _
    %v60 = vld [vmem:[#allocation2] sm:$0xf]
    %v61 = vld [vmem:[#allocation2 + $0x4] sm:$0xf]
    %v62 = vld [vmem:[%s1] sm:$0xff]
    %v63 = vld [vmem:[%s1 + $0x8] sm:$0xff]
    %v64 = vld [vmem:[%s4] sm:$0x3]
    %v66 = vperm.slane %v64, 0
    %v67 = vperm.slane %v64, 1
    %v72 = vunpack.c.l.b16 %v60
    %v73 = vunpack.c.l.b16 %v61
    %v74 = vpack.c.b16 %v73, %v72
    %v77 = vunpack.c.l.b16 %v62
    %v78 = vunpack.c.h.b16 %v62
    %v79 = vunpack.c.l.b16 %v63
    %v80 = vunpack.c.h.b16 %v63
    %v81 = vpack.c.b16 %v79, %v77
    %v82 = vpack.c.b16 %v80, %v78
    %vm85 = vcmask 130048
    %v87 = vsel %vm85, %v74, 0
    %89 = vmatpush.bf16.msra.mxu0 0
    %90 = vmatpush.bf16.msra.mxu0 0
    %91 = vmatpush.bf16.msra.mxu0 0
    %92 = vmatpush.bf16.msra.mxu0 0
    %93 = vmatpush.bf16.msra.mxu0 0
    %94 = vmatpush.bf16.msra.mxu0 0
    %95 = vmatpush.bf16.msra.mxu0 0
    %96 = vmatpush.bf16.msra.mxu0 %v81
    %97 = vmatmul.bf16.gmra.mxu0 %v87
    %v98 = vpop.f32.mrf.mxu0
    %v99 = vadd.f32 %v66, %v98
    %v100 = vpop.f32.mrf.mxu0
    %v101 = vadd.f32 %v66, %v100
    %102 = vdwg.mxu0
    %103 = vmatpush.bf16.msra.mxu0 0
    %104 = vmatpush.bf16.msra.mxu0 0
    %105 = vmatpush.bf16.msra.mxu0 0
    %106 = vmatpush.bf16.msra.mxu0 0
    %107 = vmatpush.bf16.msra.mxu0 0
    %108 = vmatpush.bf16.msra.mxu0 0
    %109 = vmatpush.bf16.msra.mxu0 0
    %110 = vmatpush.bf16.msra.mxu0 %v82
    %111 = vmatmul.bf16.gmra.mxu0 %v87
    %v112 = vpop.f32.mrf.mxu0
    %v113 = vadd.f32 %v67, %v112
    %v114 = vpop.f32.mrf.mxu0
    %v115 = vadd.f32 %v67, %v114
    %116 = vdwg.mxu0
    %v117 = vld [vmem:[%s2] sm:$0xf]
    %v118 = vld [vmem:[%s2 + $0x4] sm:$0xf]
    %v119 = vld [vmem:[%s2 + $0x8] sm:$0xf]
    %v120 = vld [vmem:[%s2 + $0xc] sm:$0xf]
    %v121 = vld [vmem:[#allocation5] sm:$0xf]
    %v122 = vld [vmem:[#allocation5 + $0x4] sm:$0xf]
    %v123 = vld [vmem:[#allocation5 + $0x8] sm:$0xf]
    %v124 = vld [vmem:[#allocation5 + $0xc] sm:$0xf]
    %v129 = vunpack.c.l.b16 %v117
    %v130 = vunpack.c.l.b16 %v118
    %v131 = vunpack.c.l.b16 %v119
    %v132 = vunpack.c.l.b16 %v120
    %v133 = vpack.c.b16 %v130, %v129
    %v134 = vpack.c.b16 %v132, %v131
    %vm137 = vcmask 261120
    %v139 = vsel %vm137, 0, 0
    %141 = vmatpush.bf16.msra.mxu0 0
    %142 = vmatpush.bf16.msra.mxu0 0
    %143 = vmatpush.bf16.msra.mxu0 0
    %144 = vmatpush.bf16.msra.mxu0 0
    %145 = vmatpush.bf16.msra.mxu0 0
    %146 = vmatpush.bf16.msra.mxu0 0
    %147 = vmatpush.bf16.msra.mxu0 %v134
    %148 = vmatpush.bf16.msra.mxu0 %v133
    %149 = vmatmul.bf16.gmra.mxu0 %v139
    %v150 = vpop.f32.mrf.mxu0
    %v151 = vadd.f32 0.0, %v150
    %v152 = vpop.f32.mrf.mxu0
    %153 = vdwg.mxu0
    %v155 = vrot.slane %v151, 1
    %v158 = vadd.f32 %v99, %v151
    %v159 = vadd.f32 %v101, %v155
    %v164 = vunpack.c.l.b16 %v121
    %v165 = vunpack.c.l.b16 %v122
    %v166 = vunpack.c.l.b16 %v123
    %v167 = vunpack.c.l.b16 %v124
    %v168 = vpack.c.b16 %v165, %v164
    %v169 = vpack.c.b16 %v167, %v166
    %172 = vmatpush.bf16.msra.mxu0 0
    %173 = vmatpush.bf16.msra.mxu0 0
    %174 = vmatpush.bf16.msra.mxu0 0
    %175 = vmatpush.bf16.msra.mxu0 0
    %176 = vmatpush.bf16.msra.mxu0 0
    %177 = vmatpush.bf16.msra.mxu0 0
    %178 = vmatpush.bf16.msra.mxu0 %v169
    %179 = vmatpush.bf16.msra.mxu0 %v168
    %180 = vmatmul.bf16.gmra.mxu0 %v139
    %v181 = vpop.f32.mrf.mxu0
    %v182 = vadd.f32 0.0, %v181
    %v183 = vpop.f32.mrf.mxu0
    %184 = vdwg.mxu0
    %v186 = vrot.slane %v182, 1
    %v187 = vrot.slane %v182, 2
    %v190 = vadd.f32 %v113, %v186
    %v191 = vadd.f32 %v115, %v187
    %v192 = vxor.u32 %v158, 2147483648
    %v193 = vxor.u32 %v159, 2147483648
    %v194 = vmul.f32 %v192, 1.442695
    %v195 = vpow.pop %v194
    %v196 = vmul.f32 %v193, 1.442695
    %v197 = vpow.pop %v196
    %v198 = vadd.f32 %v195, 1.0
    %v199 = vadd.f32 %v197, 1.0
    %v200 = vrcp.pop %v198
    %v201 = vmul.f32 %v198, %v200
    %v202 = vsub.f32 1.0, %v201
    %v203 = vmul.f32 %v200, %v202
    %v204 = vadd.f32 %v200, %v203
    %vm205 = vweird.f32 %v198
    %vm206 = vweird.f32 %v200
    %vm207 = vmor %vm205, %vm206
    %v208 = vsel %vm207, %v200, %v204
    %v209 = vand.u32 2147483647, %v198
    %vm210 = vcmp.eq.f32.partialorder %v209, 8.507059e+37
    %v211 = vand.u32 %v198, 2147483648
    %v212 = vor.u32 1.1754944e-38, %v211
    %v213 = vsel %vm210, %v212, %v208
    %v214 = vmul.f32 1.0, %v213
    %v215 = vrcp.pop %v199
    %v216 = vmul.f32 %v199, %v215
    %v217 = vsub.f32 1.0, %v216
    %v218 = vmul.f32 %v215, %v217
    %v219 = vadd.f32 %v215, %v218
    %vm220 = vweird.f32 %v199
    %vm221 = vweird.f32 %v215
    %vm222 = vmor %vm220, %vm221
    %v223 = vsel %vm222, %v215, %v219
    %v224 = vand.u32 2147483647, %v199
    %vm225 = vcmp.eq.f32.partialorder %v224, 8.507059e+37
    %v226 = vand.u32 %v199, 2147483648
    %v227 = vor.u32 1.1754944e-38, %v226
    %v228 = vsel %vm225, %v227, %v223
    %v229 = vmul.f32 1.0, %v228
    %v230 = vtanh.pop %v158
    %v231 = vtanh.pop %v159
    %v232 = vmul.f32 %v214, 0.0
    %v233 = vmul.f32 %v229, 0.0
    %236 = vrot.lane.b32.xlu0 %v230, 64
    %v237 = vpop.permute.xlu0 %236
    %238 = vrot.lane.b32.xlu0 %v231, 64
    %v239 = vpop.permute.xlu0 %238
    %v242 = vmul.f32 %v214, %v237
    %v243 = vmul.f32 %v229, %v239
    %246 = vrot.lane.b32.xlu0 %v242, 32
    %v247 = vpop.permute.xlu0 %246
    %248 = vrot.lane.b32.xlu0 %v243, 32
    %v249 = vpop.permute.xlu0 %248
    %v252 = vadd.f32 %v232, %v247
    %v253 = vadd.f32 %v233, %v249
    %v254 = vtanh.pop %v252
    %v255 = vtanh.pop %v253
    %258 = vrot.lane.b32.xlu0 %v254, 64
    %v259 = vpop.permute.xlu0 %258
    %260 = vrot.lane.b32.xlu0 %v255, 64
    %v261 = vpop.permute.xlu0 %260
    %v264 = vmul.f32 %v214, %v259
    %v265 = vmul.f32 %v229, %v261
    %v266 = vxor.u32 %v190, 2147483648
    %v267 = vxor.u32 %v191, 2147483648
    %v268 = vmul.f32 %v266, 1.442695
    %v269 = vpow.pop %v268
    %v270 = vmul.f32 %v267, 1.442695
    %v271 = vpow.pop %v270
    %v272 = vadd.f32 %v269, 1.0
    %v273 = vadd.f32 %v271, 1.0
    %v274 = vrcp.pop %v272
    %v275 = vmul.f32 %v272, %v274
    %v276 = vsub.f32 1.0, %v275
    %v277 = vmul.f32 %v274, %v276
    %v278 = vadd.f32 %v274, %v277
    %vm279 = vweird.f32 %v272
    %vm280 = vweird.f32 %v274
    %vm281 = vmor %vm279, %vm280
    %v282 = vsel %vm281, %v274, %v278
    %v283 = vand.u32 2147483647, %v272
    %vm284 = vcmp.eq.f32.partialorder %v283, 8.507059e+37
    %v285 = vand.u32 %v272, 2147483648
    %v286 = vor.u32 1.1754944e-38, %v285
    %v287 = vsel %vm284, %v286, %v282
    %v288 = vmul.f32 1.0, %v287
    %v289 = vrcp.pop %v273
    %v290 = vmul.f32 %v273, %v289
    %v291 = vsub.f32 1.0, %v290
    %v292 = vmul.f32 %v289, %v291
    %v293 = vadd.f32 %v289, %v292
    %vm294 = vweird.f32 %v273
    %vm295 = vweird.f32 %v289
    %vm296 = vmor %vm294, %vm295
    %v297 = vsel %vm296, %v289, %v293
    %v298 = vand.u32 2147483647, %v273
    %vm299 = vcmp.eq.f32.partialorder %v298, 8.507059e+37
    %v300 = vand.u32 %v273, 2147483648
    %v301 = vor.u32 1.1754944e-38, %v300
    %v302 = vsel %vm299, %v301, %v297
    %v303 = vmul.f32 1.0, %v302
    %v304 = vtanh.pop %v190
    %v305 = vtanh.pop %v191
    %v306 = vmul.f32 %v288, 0.0
    %v307 = vmul.f32 %v303, 0.0
    %310 = vrot.lane.b32.xlu0 %v304, 64
    %v311 = vpop.permute.xlu0 %310
    %312 = vrot.lane.b32.xlu0 %v305, 64
    %v313 = vpop.permute.xlu0 %312
    %v316 = vmul.f32 %v288, %v311
    %v317 = vmul.f32 %v303, %v313
    %320 = vrot.lane.b32.xlu0 %v316, 32
    %v321 = vpop.permute.xlu0 %320
    %322 = vrot.lane.b32.xlu0 %v317, 32
    %v323 = vpop.permute.xlu0 %322
    %v326 = vadd.f32 %v306, %v321
    %v327 = vadd.f32 %v307, %v323
    %v328 = vtanh.pop %v326
    %v329 = vtanh.pop %v327
    %332 = vrot.lane.b32.xlu0 %v328, 64
    %v333 = vpop.permute.xlu0 %332
    %334 = vrot.lane.b32.xlu0 %v329, 64
    %v335 = vpop.permute.xlu0 %334
    %v338 = vmul.f32 %v288, %v333
    %v339 = vmul.f32 %v303, %v335
    %v340 = vpack.c.bf16 %v264, %v264
    %v341 = vpack.c.bf16 %v265, %v265
    %v344 = vunpack.c.l.b16 %v340
    %v345 = vunpack.c.l.b16 %v341
    %v346 = vrot.slane %v345, 7
    %vm347 = vcmask 1041409
    %v348 = vsel %vm347, %v346, %v344
    %v349 = vpack.c.b16 %v348, %v348
    %350 = vrot.lane.b32.xlu0 %v349, 32
    %v351 = vpop.permute.xlu0 %350
    %v353 = vsel %vm137, %v351, 0
    %355 = vmatpush.bf16.msra.mxu0 0
    %356 = vmatpush.bf16.msra.mxu0 0
    %357 = vmatpush.bf16.msra.mxu0 0
    %358 = vmatpush.bf16.msra.mxu0 0
    %359 = vmatpush.bf16.msra.mxu0 0
    %360 = vmatpush.bf16.msra.mxu0 0
    %361 = vmatpush.bf16.msra.mxu0 %v134
    %362 = vmatpush.bf16.msra.mxu0 %v133
    %363 = vmatmul.bf16.gmra.mxu0 %v353
    %v364 = vpop.f32.mrf.mxu0
    %v365 = vadd.f32 0.0, %v364
    %v366 = vpop.f32.mrf.mxu0
    %367 = vdwg.mxu0
    %v369 = vrot.slane %v365, 7
    %v372 = vadd.f32 %v99, %v369
    %v373 = vadd.f32 %v101, %v365
    %v374 = vpack.c.bf16 %v338, %v338
    %v375 = vpack.c.bf16 %v339, %v339
    %v378 = vunpack.c.l.b16 %v374
    %v379 = vunpack.c.l.b16 %v375
    %v380 = vrot.slane %v378, 7
    %v381 = vrot.slane %v379, 6
    %v382 = vsel %vm347, %v381, %v380
    %v383 = vpack.c.b16 %v382, %v382
    %384 = vrot.lane.b32.xlu0 %v383, 32
    %v385 = vpop.permute.xlu0 %384
    %v387 = vsel %vm137, %v385, 0
    %389 = vmatpush.bf16.msra.mxu0 0
    %390 = vmatpush.bf16.msra.mxu0 0
    %391 = vmatpush.bf16.msra.mxu0 0
    %392 = vmatpush.bf16.msra.mxu0 0
    %393 = vmatpush.bf16.msra.mxu0 0
    %394 = vmatpush.bf16.msra.mxu0 0
    %395 = vmatpush.bf16.msra.mxu0 %v169
    %396 = vmatpush.bf16.msra.mxu0 %v168
    %397 = vmatmul.bf16.gmra.mxu0 %v387
    %v398 = vpop.f32.mrf.mxu0
    %v399 = vadd.f32 0.0, %v398
    %v400 = vpop.f32.mrf.mxu0
    %401 = vdwg.mxu0
    %v403 = vrot.slane %v399, 2
    %v404 = vrot.slane %v399, 3
    %v407 = vadd.f32 %v113, %v403
    %v408 = vadd.f32 %v115, %v404
    %v409 = vxor.u32 %v372, 2147483648
    %v410 = vxor.u32 %v373, 2147483648
    %v411 = vmul.f32 %v409, 1.442695
    %v412 = vpow.pop %v411
    %v413 = vmul.f32 %v410, 1.442695
    %v414 = vpow.pop %v413
    %v415 = vadd.f32 %v412, 1.0
    %v416 = vadd.f32 %v414, 1.0
    %v417 = vrcp.pop %v415
    %v418 = vmul.f32 %v415, %v417
    %v419 = vsub.f32 1.0, %v418
    %v420 = vmul.f32 %v417, %v419
    %v421 = vadd.f32 %v417, %v420
    %vm422 = vweird.f32 %v415
    %vm423 = vweird.f32 %v417
    %vm424 = vmor %vm422, %vm423
    %v425 = vsel %vm424, %v417, %v421
    %v426 = vand.u32 2147483647, %v415
    %vm427 = vcmp.eq.f32.partialorder %v426, 8.507059e+37
    %v428 = vand.u32 %v415, 2147483648
    %v429 = vor.u32 1.1754944e-38, %v428
    %v430 = vsel %vm427, %v429, %v425
    %v431 = vmul.f32 1.0, %v430
    %v432 = vrcp.pop %v416
    %v433 = vmul.f32 %v416, %v432
    %v434 = vsub.f32 1.0, %v433
    %v435 = vmul.f32 %v432, %v434
    %v436 = vadd.f32 %v432, %v435
    %vm437 = vweird.f32 %v416
    %vm438 = vweird.f32 %v432
    %vm439 = vmor %vm437, %vm438
    %v440 = vsel %vm439, %v432, %v436
    %v441 = vand.u32 2147483647, %v416
    %vm442 = vcmp.eq.f32.partialorder %v441, 8.507059e+37
    %v443 = vand.u32 %v416, 2147483648
    %v444 = vor.u32 1.1754944e-38, %v443
    %v445 = vsel %vm442, %v444, %v440
    %v446 = vmul.f32 1.0, %v445
    %v447 = vtanh.pop %v372
    %v448 = vtanh.pop %v373
    %v451 = vrot.slane %v252, 7
    %v452 = vrot.slane %v253, 7
    %v455 = vmul.f32 %v431, %v451
    %v456 = vmul.f32 %v446, %v452
    %459 = vrot.lane.b32.xlu0 %v447, 64
    %v460 = vpop.permute.xlu0 %459
    %461 = vrot.lane.b32.xlu0 %v448, 64
    %v462 = vpop.permute.xlu0 %461
    %v465 = vmul.f32 %v431, %v460
    %v466 = vmul.f32 %v446, %v462
    %469 = vrot.lane.b32.xlu0 %v465, 32
    %v470 = vpop.permute.xlu0 %469
    %471 = vrot.lane.b32.xlu0 %v466, 32
    %v472 = vpop.permute.xlu0 %471
    %v475 = vadd.f32 %v455, %v470
    %v476 = vadd.f32 %v456, %v472
    %v477 = vtanh.pop %v475
    %v478 = vtanh.pop %v476
    %481 = vrot.lane.b32.xlu0 %v477, 64
    %v482 = vpop.permute.xlu0 %481
    %483 = vrot.lane.b32.xlu0 %v478, 64
    %v484 = vpop.permute.xlu0 %483
    %v487 = vmul.f32 %v431, %v482
    %v488 = vmul.f32 %v446, %v484
    %v489 = vxor.u32 %v407, 2147483648
    %v490 = vxor.u32 %v408, 2147483648
    %v491 = vmul.f32 %v489, 1.442695
    %v492 = vpow.pop %v491
    %v493 = vmul.f32 %v490, 1.442695
    %v494 = vpow.pop %v493
    %v495 = vadd.f32 %v492, 1.0
    %v496 = vadd.f32 %v494, 1.0
    %v497 = vrcp.pop %v495
    %v498 = vmul.f32 %v495, %v497
    %v499 = vsub.f32 1.0, %v498
    %v500 = vmul.f32 %v497, %v499
    %v501 = vadd.f32 %v497, %v500
    %vm502 = vweird.f32 %v495
    %vm503 = vweird.f32 %v497
    %vm504 = vmor %vm502, %vm503
    %v505 = vsel %vm504, %v497, %v501
    %v506 = vand.u32 2147483647, %v495
    %vm507 = vcmp.eq.f32.partialorder %v506, 8.507059e+37
    %v508 = vand.u32 %v495, 2147483648
    %v509 = vor.u32 1.1754944e-38, %v508
    %v510 = vsel %vm507, %v509, %v505
    %v511 = vmul.f32 1.0, %v510
    %v512 = vrcp.pop %v496
    %v513 = vmul.f32 %v496, %v512
    %v514 = vsub.f32 1.0, %v513
    %v515 = vmul.f32 %v512, %v514
    %v516 = vadd.f32 %v512, %v515
    %vm517 = vweird.f32 %v496
    %vm518 = vweird.f32 %v512
    %vm519 = vmor %vm517, %vm518
    %v520 = vsel %vm519, %v512, %v516
    %v521 = vand.u32 2147483647, %v496
    %vm522 = vcmp.eq.f32.partialorder %v521, 8.507059e+37
    %v523 = vand.u32 %v496, 2147483648
    %v524 = vor.u32 1.1754944e-38, %v523
    %v525 = vsel %vm522, %v524, %v520
    %v526 = vmul.f32 1.0, %v525
    %v527 = vtanh.pop %v407
    %v528 = vtanh.pop %v408
    %v531 = vrot.slane %v326, 1
    %v532 = vrot.slane %v327, 1
    %v535 = vmul.f32 %v511, %v531
    %v536 = vmul.f32 %v526, %v532
    %539 = vrot.lane.b32.xlu0 %v527, 64
    %v540 = vpop.permute.xlu0 %539
    %541 = vrot.lane.b32.xlu0 %v528, 64
    %v542 = vpop.permute.xlu0 %541
    %v545 = vmul.f32 %v511, %v540
    %v546 = vmul.f32 %v526, %v542
    %549 = vrot.lane.b32.xlu0 %v545, 32
    %v550 = vpop.permute.xlu0 %549
    %551 = vrot.lane.b32.xlu0 %v546, 32
    %v552 = vpop.permute.xlu0 %551
    %v555 = vadd.f32 %v535, %v550
    %v556 = vadd.f32 %v536, %v552
    %v557 = vtanh.pop %v555
    %v558 = vtanh.pop %v556
    %561 = vrot.lane.b32.xlu0 %v557, 64
    %v562 = vpop.permute.xlu0 %561
    %563 = vrot.lane.b32.xlu0 %v558, 64
    %v564 = vpop.permute.xlu0 %563
    %v567 = vmul.f32 %v511, %v562
    %v568 = vmul.f32 %v526, %v564
    %v569 = vpack.c.bf16 %v487, %v487
    %v570 = vpack.c.bf16 %v488, %v488
    %v573 = vunpack.c.l.b16 %v569
    %v574 = vunpack.c.l.b16 %v570
    %v575 = vrot.slane %v573, 1
    %v576 = vsel %vm347, %v574, %v575
    %v577 = vpack.c.b16 %v576, %v576
    %578 = vrot.lane.b32.xlu0 %v577, 32
    %v579 = vpop.permute.xlu0 %578
    %v581 = vsel %vm137, %v579, 0
    %583 = vmatpush.bf16.msra.mxu0 0
    %584 = vmatpush.bf16.msra.mxu0 0
    %585 = vmatpush.bf16.msra.mxu0 0
    %586 = vmatpush.bf16.msra.mxu0 0
    %587 = vmatpush.bf16.msra.mxu0 0
    %588 = vmatpush.bf16.msra.mxu0 0
    %589 = vmatpush.bf16.msra.mxu0 %v134
    %590 = vmatpush.bf16.msra.mxu0 %v133
    %591 = vmatmul.bf16.gmra.mxu0 %v581
    %v592 = vpop.f32.mrf.mxu0
    %v593 = vadd.f32 0.0, %v592
    %v594 = vpop.f32.mrf.mxu0
    %595 = vdwg.mxu0
    %v597 = vrot.slane %v593, 6
    %v598 = vrot.slane %v593, 7
    %v601 = vadd.f32 %v99, %v597
    %v602 = vadd.f32 %v101, %v598
    %v603 = vpack.c.bf16 %v567, %v567
    %v604 = vpack.c.bf16 %v568, %v568
    %v607 = vunpack.c.l.b16 %v603
    %v608 = vunpack.c.l.b16 %v604
    %v609 = vrot.slane %v607, 6
    %v610 = vrot.slane %v608, 5
    %v611 = vsel %vm347, %v610, %v609
    %v612 = vpack.c.b16 %v611, %v611
    %613 = vrot.lane.b32.xlu0 %v612, 32
    %v614 = vpop.permute.xlu0 %613
    %v616 = vsel %vm137, %v614, 0
    %618 = vmatpush.bf16.msra.mxu0 0
    %619 = vmatpush.bf16.msra.mxu0 0
    %620 = vmatpush.bf16.msra.mxu0 0
    %621 = vmatpush.bf16.msra.mxu0 0
    %622 = vmatpush.bf16.msra.mxu0 0
    %623 = vmatpush.bf16.msra.mxu0 0
    %624 = vmatpush.bf16.msra.mxu0 %v169
    %625 = vmatpush.bf16.msra.mxu0 %v168
    %626 = vmatmul.bf16.gmra.mxu0 %v616
    %v627 = vpop.f32.mrf.mxu0
    %v628 = vadd.f32 0.0, %v627
    %v629 = vpop.f32.mrf.mxu0
    %630 = vdwg.mxu0
    %v632 = vrot.slane %v628, 3
    %v633 = vrot.slane %v628, 4
    %v636 = vadd.f32 %v113, %v632
    %v637 = vadd.f32 %v115, %v633
    %v638 = vxor.u32 %v601, 2147483648
    %v639 = vxor.u32 %v602, 2147483648
    %v640 = vmul.f32 %v638, 1.442695
    %v641 = vpow.pop %v640
    %v642 = vmul.f32 %v639, 1.442695
    %v643 = vpow.pop %v642
    %v644 = vadd.f32 %v641, 1.0
    %v645 = vadd.f32 %v643, 1.0
    %v646 = vrcp.pop %v644
    %v647 = vmul.f32 %v644, %v646
    %v648 = vsub.f32 1.0, %v647
    %v649 = vmul.f32 %v646, %v648
    %v650 = vadd.f32 %v646, %v649
    %vm651 = vweird.f32 %v644
    %vm652 = vweird.f32 %v646
    %vm653 = vmor %vm651, %vm652
    %v654 = vsel %vm653, %v646, %v650
    %v655 = vand.u32 2147483647, %v644
    %vm656 = vcmp.eq.f32.partialorder %v655, 8.507059e+37
    %v657 = vand.u32 %v644, 2147483648
    %v658 = vor.u32 1.1754944e-38, %v657
    %v659 = vsel %vm656, %v658, %v654
    %v660 = vmul.f32 1.0, %v659
    %v661 = vrcp.pop %v645
    %v662 = vmul.f32 %v645, %v661
    %v663 = vsub.f32 1.0, %v662
    %v664 = vmul.f32 %v661, %v663
    %v665 = vadd.f32 %v661, %v664
    %vm666 = vweird.f32 %v645
    %vm667 = vweird.f32 %v661
    %vm668 = vmor %vm666, %vm667
    %v669 = vsel %vm668, %v661, %v665
    %v670 = vand.u32 2147483647, %v645
    %vm671 = vcmp.eq.f32.partialorder %v670, 8.507059e+37
    %v672 = vand.u32 %v645, 2147483648
    %v673 = vor.u32 1.1754944e-38, %v672
    %v674 = vsel %vm671, %v673, %v669
    %v675 = vmul.f32 1.0, %v674
    %v676 = vtanh.pop %v601
    %v677 = vtanh.pop %v602
    %v680 = vrot.slane %v475, 7
    %v681 = vrot.slane %v476, 7
    %v684 = vmul.f32 %v660, %v680
    %v685 = vmul.f32 %v675, %v681
    %688 = vrot.lane.b32.xlu0 %v676, 64
    %v689 = vpop.permute.xlu0 %688
    %690 = vrot.lane.b32.xlu0 %v677, 64
    %v691 = vpop.permute.xlu0 %690
    %v694 = vmul.f32 %v660, %v689
    %v695 = vmul.f32 %v675, %v691
    %698 = vrot.lane.b32.xlu0 %v694, 32
    %v699 = vpop.permute.xlu0 %698
    %700 = vrot.lane.b32.xlu0 %v695, 32
    %v701 = vpop.permute.xlu0 %700
    %v704 = vadd.f32 %v684, %v699
    %v705 = vadd.f32 %v685, %v701
    %v706 = vtanh.pop %v704
    %v707 = vtanh.pop %v705
    %710 = vrot.lane.b32.xlu0 %v706, 64
    %v711 = vpop.permute.xlu0 %710
    %712 = vrot.lane.b32.xlu0 %v707, 64
    %v713 = vpop.permute.xlu0 %712
    %v716 = vmul.f32 %v660, %v711
    %v717 = vmul.f32 %v675, %v713
    %v718 = vxor.u32 %v636, 2147483648
    %v719 = vxor.u32 %v637, 2147483648
    %v720 = vmul.f32 %v718, 1.442695
    %v721 = vpow.pop %v720
    %v722 = vmul.f32 %v719, 1.442695
    %v723 = vpow.pop %v722
    %v724 = vadd.f32 %v721, 1.0
    %v725 = vadd.f32 %v723, 1.0
    %v726 = vrcp.pop %v724
    %v727 = vmul.f32 %v724, %v726
    %v728 = vsub.f32 1.0, %v727
    %v729 = vmul.f32 %v726, %v728
    %v730 = vadd.f32 %v726, %v729
    %vm731 = vweird.f32 %v724
    %vm732 = vweird.f32 %v726
    %vm733 = vmor %vm731, %vm732
    %v734 = vsel %vm733, %v726, %v730
    %v735 = vand.u32 2147483647, %v724
    %vm736 = vcmp.eq.f32.partialorder %v735, 8.507059e+37
    %v737 = vand.u32 %v724, 2147483648
    %v738 = vor.u32 1.1754944e-38, %v737
    %v739 = vsel %vm736, %v738, %v734
    %v740 = vmul.f32 1.0, %v739
    %v741 = vrcp.pop %v725
    %v742 = vmul.f32 %v725, %v741
    %v743 = vsub.f32 1.0, %v742
    %v744 = vmul.f32 %v741, %v743
    %v745 = vadd.f32 %v741, %v744
    %vm746 = vweird.f32 %v725
    %vm747 = vweird.f32 %v741
    %vm748 = vmor %vm746, %vm747
    %v749 = vsel %vm748, %v741, %v745
    %v750 = vand.u32 2147483647, %v725
    %vm751 = vcmp.eq.f32.partialorder %v750, 8.507059e+37
    %v752 = vand.u32 %v725, 2147483648
    %v753 = vor.u32 1.1754944e-38, %v752
    %v754 = vsel %vm751, %v753, %v749
    %v755 = vmul.f32 1.0, %v754
    %v756 = vtanh.pop %v636
    %v757 = vtanh.pop %v637
    %v760 = vrot.slane %v555, 1
    %v761 = vrot.slane %v556, 1
    %v764 = vmul.f32 %v740, %v760
    %v765 = vmul.f32 %v755, %v761
    %768 = vrot.lane.b32.xlu0 %v756, 64
    %v769 = vpop.permute.xlu0 %768
    %770 = vrot.lane.b32.xlu0 %v757, 64
    %v771 = vpop.permute.xlu0 %770
    %v774 = vmul.f32 %v740, %v769
    %v775 = vmul.f32 %v755, %v771
    %778 = vrot.lane.b32.xlu0 %v774, 32
    %v779 = vpop.permute.xlu0 %778
    %780 = vrot.lane.b32.xlu0 %v775, 32
    %v781 = vpop.permute.xlu0 %780
    %v784 = vadd.f32 %v764, %v779
    %v785 = vadd.f32 %v765, %v781
    %v786 = vtanh.pop %v784
    %v787 = vtanh.pop %v785
    %790 = vrot.lane.b32.xlu0 %v786, 64
    %v791 = vpop.permute.xlu0 %790
    %792 = vrot.lane.b32.xlu0 %v787, 64
    %v793 = vpop.permute.xlu0 %792
    %v796 = vmul.f32 %v740, %v791
    %v797 = vmul.f32 %v755, %v793
    %v798 = vpack.c.bf16 %v716, %v716
    %v799 = vpack.c.bf16 %v717, %v717
    %v802 = vunpack.c.l.b16 %v798
    %v803 = vunpack.c.l.b16 %v799
    %v804 = vrot.slane %v802, 2
    %v805 = vrot.slane %v803, 1
    %v806 = vsel %vm347, %v805, %v804
    %v807 = vpack.c.b16 %v806, %v806
    %808 = vrot.lane.b32.xlu0 %v807, 32
    %v809 = vpop.permute.xlu0 %808
    %v811 = vsel %vm137, %v809, 0
    %813 = vmatpush.bf16.msra.mxu0 0
    %814 = vmatpush.bf16.msra.mxu0 0
    %815 = vmatpush.bf16.msra.mxu0 0
    %816 = vmatpush.bf16.msra.mxu0 0
    %817 = vmatpush.bf16.msra.mxu0 0
    %818 = vmatpush.bf16.msra.mxu0 0
    %819 = vmatpush.bf16.msra.mxu0 %v134
    %820 = vmatpush.bf16.msra.mxu0 %v133
    %821 = vmatmul.bf16.gmra.mxu0 %v811
    %v822 = vpop.f32.mrf.mxu0
    %v823 = vadd.f32 0.0, %v822
    %v824 = vpop.f32.mrf.mxu0
    %825 = vdwg.mxu0
    %v827 = vrot.slane %v823, 5
    %v828 = vrot.slane %v823, 6
    %v831 = vadd.f32 %v99, %v827
    %v832 = vadd.f32 %v101, %v828
    %v833 = vpack.c.bf16 %v796, %v796
    %v834 = vpack.c.bf16 %v797, %v797
    %v837 = vunpack.c.l.b16 %v833
    %v838 = vunpack.c.l.b16 %v834
    %v839 = vrot.slane %v837, 5
    %v840 = vrot.slane %v838, 4
    %v841 = vsel %vm347, %v840, %v839
    %v842 = vpack.c.b16 %v841, %v841
    %843 = vrot.lane.b32.xlu0 %v842, 32
    %v844 = vpop.permute.xlu0 %843
    %v846 = vsel %vm137, %v844, 0
    %848 = vmatpush.bf16.msra.mxu0 0
    %849 = vmatpush.bf16.msra.mxu0 0
    %850 = vmatpush.bf16.msra.mxu0 0
    %851 = vmatpush.bf16.msra.mxu0 0
    %852 = vmatpush.bf16.msra.mxu0 0
    %853 = vmatpush.bf16.msra.mxu0 0
    %854 = vmatpush.bf16.msra.mxu0 %v169
    %855 = vmatpush.bf16.msra.mxu0 %v168
    %856 = vmatmul.bf16.gmra.mxu0 %v846
    %v857 = vpop.f32.mrf.mxu0
    %v858 = vadd.f32 0.0, %v857
    %v859 = vpop.f32.mrf.mxu0
    %860 = vdwg.mxu0
    %v862 = vrot.slane %v858, 4
    %v863 = vrot.slane %v858, 5
    %v866 = vadd.f32 %v113, %v862
    %v867 = vadd.f32 %v115, %v863
    %v868 = vxor.u32 %v831, 2147483648
    %v869 = vxor.u32 %v832, 2147483648
    %v870 = vmul.f32 %v868, 1.442695
    %v871 = vpow.pop %v870
    %v872 = vmul.f32 %v869, 1.442695
    %v873 = vpow.pop %v872
    %v874 = vadd.f32 %v871, 1.0
    %v875 = vadd.f32 %v873, 1.0
    %v876 = vrcp.pop %v874
    %v877 = vmul.f32 %v874, %v876
    %v878 = vsub.f32 1.0, %v877
    %v879 = vmul.f32 %v876, %v878
    %v880 = vadd.f32 %v876, %v879
    %vm881 = vweird.f32 %v874
    %vm882 = vweird.f32 %v876
    %vm883 = vmor %vm881, %vm882
    %v884 = vsel %vm883, %v876, %v880
    %v885 = vand.u32 2147483647, %v874
    %vm886 = vcmp.eq.f32.partialorder %v885, 8.507059e+37
    %v887 = vand.u32 %v874, 2147483648
    %v888 = vor.u32 1.1754944e-38, %v887
    %v889 = vsel %vm886, %v888, %v884
    %v890 = vmul.f32 1.0, %v889
    %v891 = vrcp.pop %v875
    %v892 = vmul.f32 %v875, %v891
    %v893 = vsub.f32 1.0, %v892
    %v894 = vmul.f32 %v891, %v893
    %v895 = vadd.f32 %v891, %v894
    %vm896 = vweird.f32 %v875
    %vm897 = vweird.f32 %v891
    %vm898 = vmor %vm896, %vm897
    %v899 = vsel %vm898, %v891, %v895
    %v900 = vand.u32 2147483647, %v875
    %vm901 = vcmp.eq.f32.partialorder %v900, 8.507059e+37
    %v902 = vand.u32 %v875, 2147483648
    %v903 = vor.u32 1.1754944e-38, %v902
    %v904 = vsel %vm901, %v903, %v899
    %v905 = vmul.f32 1.0, %v904
    %v906 = vtanh.pop %v831
    %v907 = vtanh.pop %v832
    %v910 = vrot.slane %v704, 7
    %v911 = vrot.slane %v705, 7
    %v914 = vmul.f32 %v890, %v910
    %v915 = vmul.f32 %v905, %v911
    %918 = vrot.lane.b32.xlu0 %v906, 64
    %v919 = vpop.permute.xlu0 %918
    %920 = vrot.lane.b32.xlu0 %v907, 64
    %v921 = vpop.permute.xlu0 %920
    %v924 = vmul.f32 %v890, %v919
    %v925 = vmul.f32 %v905, %v921
    %928 = vrot.lane.b32.xlu0 %v924, 32
    %v929 = vpop.permute.xlu0 %928
    %930 = vrot.lane.b32.xlu0 %v925, 32
    %v931 = vpop.permute.xlu0 %930
    %v934 = vadd.f32 %v914, %v929
    %v935 = vadd.f32 %v915, %v931
    %v936 = vtanh.pop %v934
    %v937 = vtanh.pop %v935
    %940 = vrot.lane.b32.xlu0 %v936, 64
    %v941 = vpop.permute.xlu0 %940
    %942 = vrot.lane.b32.xlu0 %v937, 64
    %v943 = vpop.permute.xlu0 %942
    %v946 = vmul.f32 %v890, %v941
    %v947 = vmul.f32 %v905, %v943
    %v948 = vxor.u32 %v866, 2147483648
    %v949 = vxor.u32 %v867, 2147483648
    %v950 = vmul.f32 %v948, 1.442695
    %v951 = vpow.pop %v950
    %v952 = vmul.f32 %v949, 1.442695
    %v953 = vpow.pop %v952
    %v954 = vadd.f32 %v951, 1.0
    %v955 = vadd.f32 %v953, 1.0
    %v956 = vrcp.pop %v954
    %v957 = vmul.f32 %v954, %v956
    %v958 = vsub.f32 1.0, %v957
    %v959 = vmul.f32 %v956, %v958
    %v960 = vadd.f32 %v956, %v959
    %vm961 = vweird.f32 %v954
    %vm962 = vweird.f32 %v956
    %vm963 = vmor %vm961, %vm962
    %v964 = vsel %vm963, %v956, %v960
    %v965 = vand.u32 2147483647, %v954
    %vm966 = vcmp.eq.f32.partialorder %v965, 8.507059e+37
    %v967 = vand.u32 %v954, 2147483648
    %v968 = vor.u32 1.1754944e-38, %v967
    %v969 = vsel %vm966, %v968, %v964
    %v970 = vmul.f32 1.0, %v969
    %v971 = vrcp.pop %v955
    %v972 = vmul.f32 %v955, %v971
    %v973 = vsub.f32 1.0, %v972
    %v974 = vmul.f32 %v971, %v973
    %v975 = vadd.f32 %v971, %v974
    %vm976 = vweird.f32 %v955
    %vm977 = vweird.f32 %v971
    %vm978 = vmor %vm976, %vm977
    %v979 = vsel %vm978, %v971, %v975
    %v980 = vand.u32 2147483647, %v955
    %vm981 = vcmp.eq.f32.partialorder %v980, 8.507059e+37
    %v982 = vand.u32 %v955, 2147483648
    %v983 = vor.u32 1.1754944e-38, %v982
    %v984 = vsel %vm981, %v983, %v979
    %v985 = vmul.f32 1.0, %v984
    %v986 = vtanh.pop %v866
    %v987 = vtanh.pop %v867
    %v990 = vrot.slane %v784, 1
    %v991 = vrot.slane %v785, 1
    %v994 = vmul.f32 %v970, %v990
    %v995 = vmul.f32 %v985, %v991
    %998 = vrot.lane.b32.xlu0 %v986, 64
    %v999 = vpop.permute.xlu0 %998
    %1000 = vrot.lane.b32.xlu0 %v987, 64
    %v1001 = vpop.permute.xlu0 %1000
    %v1004 = vmul.f32 %v970, %v999
    %v1005 = vmul.f32 %v985, %v1001
    %1008 = vrot.lane.b32.xlu0 %v1004, 32
    %v1009 = vpop.permute.xlu0 %1008
    %1010 = vrot.lane.b32.xlu0 %v1005, 32
    %v1011 = vpop.permute.xlu0 %1010
    %v1014 = vadd.f32 %v994, %v1009
    %v1015 = vadd.f32 %v995, %v1011
    %v1016 = vtanh.pop %v1014
    %v1017 = vtanh.pop %v1015
    %1020 = vrot.lane.b32.xlu0 %v1016, 64
    %v1021 = vpop.permute.xlu0 %1020
    %1022 = vrot.lane.b32.xlu0 %v1017, 64
    %v1023 = vpop.permute.xlu0 %1022
    %v1026 = vmul.f32 %v970, %v1021
    %v1027 = vmul.f32 %v985, %v1023
    %v1028 = vpack.c.bf16 %v946, %v946
    %v1029 = vpack.c.bf16 %v947, %v947
    %v1032 = vunpack.c.l.b16 %v1028
    %v1033 = vunpack.c.l.b16 %v1029
    %v1034 = vrot.slane %v1032, 3
    %v1035 = vrot.slane %v1033, 2
    %v1036 = vsel %vm347, %v1035, %v1034
    %v1037 = vpack.c.b16 %v1036, %v1036
    %1038 = vrot.lane.b32.xlu0 %v1037, 32
    %v1039 = vpop.permute.xlu0 %1038
    %v1041 = vsel %vm137, %v1039, 0
    %1043 = vmatpush.bf16.msra.mxu0 0
    %1044 = vmatpush.bf16.msra.mxu0 0
    %1045 = vmatpush.bf16.msra.mxu0 0
    %1046 = vmatpush.bf16.msra.mxu0 0
    %1047 = vmatpush.bf16.msra.mxu0 0
    %1048 = vmatpush.bf16.msra.mxu0 0
    %1049 = vmatpush.bf16.msra.mxu0 %v134
    %1050 = vmatpush.bf16.msra.mxu0 %v133
    %1051 = vmatmul.bf16.gmra.mxu0 %v1041
    %v1052 = vpop.f32.mrf.mxu0
    %v1053 = vadd.f32 0.0, %v1052
    %v1054 = vpop.f32.mrf.mxu0
    %1055 = vdwg.mxu0
    %v1057 = vrot.slane %v1053, 4
    %v1058 = vrot.slane %v1053, 5
    %v1061 = vadd.f32 %v99, %v1057
    %v1062 = vadd.f32 %v101, %v1058
    %v1063 = vpack.c.bf16 %v1026, %v1026
    %v1064 = vpack.c.bf16 %v1027, %v1027
    %v1067 = vunpack.c.l.b16 %v1063
    %v1068 = vunpack.c.l.b16 %v1064
    %v1069 = vrot.slane %v1067, 4
    %v1070 = vrot.slane %v1068, 3
    %v1071 = vsel %vm347, %v1070, %v1069
    %v1072 = vpack.c.b16 %v1071, %v1071
    %1073 = vrot.lane.b32.xlu0 %v1072, 32
    %v1074 = vpop.permute.xlu0 %1073
    %v1076 = vsel %vm137, %v1074, 0
    %1078 = vmatpush.bf16.msra.mxu0 0
    %1079 = vmatpush.bf16.msra.mxu0 0
    %1080 = vmatpush.bf16.msra.mxu0 0
    %1081 = vmatpush.bf16.msra.mxu0 0
    %1082 = vmatpush.bf16.msra.mxu0 0
    %1083 = vmatpush.bf16.msra.mxu0 0
    %1084 = vmatpush.bf16.msra.mxu0 %v169
    %1085 = vmatpush.bf16.msra.mxu0 %v168
    %1086 = vmatmul.bf16.gmra.mxu0 %v1076
    %v1087 = vpop.f32.mrf.mxu0
    %v1088 = vadd.f32 0.0, %v1087
    %v1089 = vpop.f32.mrf.mxu0
    %1090 = vdwg.mxu0
    %v1092 = vrot.slane %v1088, 5
    %v1093 = vrot.slane %v1088, 6
    %v1096 = vadd.f32 %v113, %v1092
    %v1097 = vadd.f32 %v115, %v1093
    %v1098 = vxor.u32 %v1061, 2147483648
    %v1099 = vxor.u32 %v1062, 2147483648
    %v1100 = vmul.f32 %v1098, 1.442695
    %v1101 = vpow.pop %v1100
    %v1102 = vmul.f32 %v1099, 1.442695
    %v1103 = vpow.pop %v1102
    %v1104 = vadd.f32 %v1101, 1.0
    %v1105 = vadd.f32 %v1103, 1.0
    %v1106 = vrcp.pop %v1104
    %v1107 = vmul.f32 %v1104, %v1106
    %v1108 = vsub.f32 1.0, %v1107
    %v1109 = vmul.f32 %v1106, %v1108
    %v1110 = vadd.f32 %v1106, %v1109
    %vm1111 = vweird.f32 %v1104
    %vm1112 = vweird.f32 %v1106
    %vm1113 = vmor %vm1111, %vm1112
    %v1114 = vsel %vm1113, %v1106, %v1110
    %v1115 = vand.u32 2147483647, %v1104
    %vm1116 = vcmp.eq.f32.partialorder %v1115, 8.507059e+37
    %v1117 = vand.u32 %v1104, 2147483648
    %v1118 = vor.u32 1.1754944e-38, %v1117
    %v1119 = vsel %vm1116, %v1118, %v1114
    %v1120 = vmul.f32 1.0, %v1119
    %v1121 = vrcp.pop %v1105
    %v1122 = vmul.f32 %v1105, %v1121
    %v1123 = vsub.f32 1.0, %v1122
    %v1124 = vmul.f32 %v1121, %v1123
    %v1125 = vadd.f32 %v1121, %v1124
    %vm1126 = vweird.f32 %v1105
    %vm1127 = vweird.f32 %v1121
    %vm1128 = vmor %vm1126, %vm1127
    %v1129 = vsel %vm1128, %v1121, %v1125
    %v1130 = vand.u32 2147483647, %v1105
    %vm1131 = vcmp.eq.f32.partialorder %v1130, 8.507059e+37
    %v1132 = vand.u32 %v1105, 2147483648
    %v1133 = vor.u32 1.1754944e-38, %v1132
    %v1134 = vsel %vm1131, %v1133, %v1129
    %v1135 = vmul.f32 1.0, %v1134
    %v1136 = vtanh.pop %v1061
    %v1137 = vtanh.pop %v1062
    %v1140 = vrot.slane %v934, 7
    %v1141 = vrot.slane %v935, 7
    %v1144 = vmul.f32 %v1120, %v1140
    %v1145 = vmul.f32 %v1135, %v1141
    %1148 = vrot.lane.b32.xlu0 %v1136, 64
    %v1149 = vpop.permute.xlu0 %1148
    %1150 = vrot.lane.b32.xlu0 %v1137, 64
    %v1151 = vpop.permute.xlu0 %1150
    %v1154 = vmul.f32 %v1120, %v1149
    %v1155 = vmul.f32 %v1135, %v1151
    %1158 = vrot.lane.b32.xlu0 %v1154, 32
    %v1159 = vpop.permute.xlu0 %1158
    %1160 = vrot.lane.b32.xlu0 %v1155, 32
    %v1161 = vpop.permute.xlu0 %1160
    %v1164 = vadd.f32 %v1144, %v1159
    %v1165 = vadd.f32 %v1145, %v1161
    %v1166 = vtanh.pop %v1164
    %v1167 = vtanh.pop %v1165
    %1170 = vrot.lane.b32.xlu0 %v1166, 64
    %v1171 = vpop.permute.xlu0 %1170
    %1172 = vrot.lane.b32.xlu0 %v1167, 64
    %v1173 = vpop.permute.xlu0 %1172
    %v1176 = vmul.f32 %v1120, %v1171
    %v1177 = vmul.f32 %v1135, %v1173
    %v1178 = vxor.u32 %v1096, 2147483648
    %v1179 = vxor.u32 %v1097, 2147483648
    %v1180 = vmul.f32 %v1178, 1.442695
    %v1181 = vpow.pop %v1180
    %v1182 = vmul.f32 %v1179, 1.442695
    %v1183 = vpow.pop %v1182
    %v1184 = vadd.f32 %v1181, 1.0
    %v1185 = vadd.f32 %v1183, 1.0
    %v1186 = vrcp.pop %v1184
    %v1187 = vmul.f32 %v1184, %v1186
    %v1188 = vsub.f32 1.0, %v1187
    %v1189 = vmul.f32 %v1186, %v1188
    %v1190 = vadd.f32 %v1186, %v1189
    %vm1191 = vweird.f32 %v1184
    %vm1192 = vweird.f32 %v1186
    %vm1193 = vmor %vm1191, %vm1192
    %v1194 = vsel %vm1193, %v1186, %v1190
    %v1195 = vand.u32 2147483647, %v1184
    %vm1196 = vcmp.eq.f32.partialorder %v1195, 8.507059e+37
    %v1197 = vand.u32 %v1184, 2147483648
    %v1198 = vor.u32 1.1754944e-38, %v1197
    %v1199 = vsel %vm1196, %v1198, %v1194
    %v1200 = vmul.f32 1.0, %v1199
    %v1201 = vrcp.pop %v1185
    %v1202 = vmul.f32 %v1185, %v1201
    %v1203 = vsub.f32 1.0, %v1202
    %v1204 = vmul.f32 %v1201, %v1203
    %v1205 = vadd.f32 %v1201, %v1204
    %vm1206 = vweird.f32 %v1185
    %vm1207 = vweird.f32 %v1201
    %vm1208 = vmor %vm1206, %vm1207
    %v1209 = vsel %vm1208, %v1201, %v1205
    %v1210 = vand.u32 2147483647, %v1185
    %vm1211 = vcmp.eq.f32.partialorder %v1210, 8.507059e+37
    %v1212 = vand.u32 %v1185, 2147483648
    %v1213 = vor.u32 1.1754944e-38, %v1212
    %v1214 = vsel %vm1211, %v1213, %v1209
    %v1215 = vmul.f32 1.0, %v1214
    %v1216 = vtanh.pop %v1096
    %v1217 = vtanh.pop %v1097
    %v1220 = vrot.slane %v1014, 1
    %v1221 = vrot.slane %v1015, 1
    %v1224 = vmul.f32 %v1200, %v1220
    %v1225 = vmul.f32 %v1215, %v1221
    %1228 = vrot.lane.b32.xlu0 %v1216, 64
    %v1229 = vpop.permute.xlu0 %1228
    %1230 = vrot.lane.b32.xlu0 %v1217, 64
    %v1231 = vpop.permute.xlu0 %1230
    %v1234 = vmul.f32 %v1200, %v1229
    %v1235 = vmul.f32 %v1215, %v1231
    %1238 = vrot.lane.b32.xlu0 %v1234, 32
    %v1239 = vpop.permute.xlu0 %1238
    %1240 = vrot.lane.b32.xlu0 %v1235, 32
    %v1241 = vpop.permute.xlu0 %1240
    %v1244 = vadd.f32 %v1224, %v1239
    %v1245 = vadd.f32 %v1225, %v1241
    %v1246 = vtanh.pop %v1244
    %v1247 = vtanh.pop %v1245
    %1250 = vrot.lane.b32.xlu0 %v1246, 64
    %v1251 = vpop.permute.xlu0 %1250
    %1252 = vrot.lane.b32.xlu0 %v1247, 64
    %v1253 = vpop.permute.xlu0 %1252
    %v1256 = vmul.f32 %v1200, %v1251
    %v1257 = vmul.f32 %v1215, %v1253
    %v1258 = vpack.c.bf16 %v1176, %v1176
    %v1259 = vpack.c.bf16 %v1177, %v1177
    %v1262 = vunpack.c.l.b16 %v1258
    %v1263 = vunpack.c.l.b16 %v1259
    %v1264 = vrot.slane %v1262, 4
    %v1265 = vrot.slane %v1263, 3
    %v1266 = vsel %vm347, %v1265, %v1264
    %v1267 = vpack.c.b16 %v1266, %v1266
    %1268 = vrot.lane.b32.xlu0 %v1267, 32
    %v1269 = vpop.permute.xlu0 %1268
    %v1271 = vsel %vm137, %v1269, 0
    %1273 = vmatpush.bf16.msra.mxu0 0
    %1274 = vmatpush.bf16.msra.mxu0 0
    %1275 = vmatpush.bf16.msra.mxu0 0
    %1276 = vmatpush.bf16.msra.mxu0 0
    %1277 = vmatpush.bf16.msra.mxu0 0
    %1278 = vmatpush.bf16.msra.mxu0 0
    %1279 = vmatpush.bf16.msra.mxu0 %v134
    %1280 = vmatpush.bf16.msra.mxu0 %v133
    %1281 = vmatmul.bf16.gmra.mxu0 %v1271
    %v1282 = vpop.f32.mrf.mxu0
    %v1283 = vadd.f32 0.0, %v1282
    %v1284 = vpop.f32.mrf.mxu0
    %1285 = vdwg.mxu0
    %v1287 = vrot.slane %v1283, 3
    %v1288 = vrot.slane %v1283, 4
    %v1291 = vadd.f32 %v99, %v1287
    %v1292 = vadd.f32 %v101, %v1288
    %v1293 = vpack.c.bf16 %v1256, %v1256
    %v1294 = vpack.c.bf16 %v1257, %v1257
    %v1297 = vunpack.c.l.b16 %v1293
    %v1298 = vunpack.c.l.b16 %v1294
    %v1299 = vrot.slane %v1297, 3
    %v1300 = vrot.slane %v1298, 2
    %v1301 = vsel %vm347, %v1300, %v1299
    %v1302 = vpack.c.b16 %v1301, %v1301
    %1303 = vrot.lane.b32.xlu0 %v1302, 32
    %v1304 = vpop.permute.xlu0 %1303
    %v1306 = vsel %vm137, %v1304, 0
    %1308 = vmatpush.bf16.msra.mxu0 0
    %1309 = vmatpush.bf16.msra.mxu0 0
    %1310 = vmatpush.bf16.msra.mxu0 0
    %1311 = vmatpush.bf16.msra.mxu0 0
    %1312 = vmatpush.bf16.msra.mxu0 0
    %1313 = vmatpush.bf16.msra.mxu0 0
    %1314 = vmatpush.bf16.msra.mxu0 %v169
    %1315 = vmatpush.bf16.msra.mxu0 %v168
    %1316 = vmatmul.bf16.gmra.mxu0 %v1306
    %v1317 = vpop.f32.mrf.mxu0
    %v1318 = vadd.f32 0.0, %v1317
    %v1319 = vpop.f32.mrf.mxu0
    %1320 = vdwg.mxu0
    %v1322 = vrot.slane %v1318, 6
    %v1323 = vrot.slane %v1318, 7
    %v1326 = vadd.f32 %v113, %v1322
    %v1327 = vadd.f32 %v115, %v1323
    %v1328 = vxor.u32 %v1291, 2147483648
    %v1329 = vxor.u32 %v1292, 2147483648
    %v1330 = vmul.f32 %v1328, 1.442695
    %v1331 = vpow.pop %v1330
    %v1332 = vmul.f32 %v1329, 1.442695
    %v1333 = vpow.pop %v1332
    %v1334 = vadd.f32 %v1331, 1.0
    %v1335 = vadd.f32 %v1333, 1.0
    %v1336 = vrcp.pop %v1334
    %v1337 = vmul.f32 %v1334, %v1336
    %v1338 = vsub.f32 1.0, %v1337
    %v1339 = vmul.f32 %v1336, %v1338
    %v1340 = vadd.f32 %v1336, %v1339
    %vm1341 = vweird.f32 %v1334
    %vm1342 = vweird.f32 %v1336
    %vm1343 = vmor %vm1341, %vm1342
    %v1344 = vsel %vm1343, %v1336, %v1340
    %v1345 = vand.u32 2147483647, %v1334
    %vm1346 = vcmp.eq.f32.partialorder %v1345, 8.507059e+37
    %v1347 = vand.u32 %v1334, 2147483648
    %v1348 = vor.u32 1.1754944e-38, %v1347
    %v1349 = vsel %vm1346, %v1348, %v1344
    %v1350 = vmul.f32 1.0, %v1349
    %v1351 = vrcp.pop %v1335
    %v1352 = vmul.f32 %v1335, %v1351
    %v1353 = vsub.f32 1.0, %v1352
    %v1354 = vmul.f32 %v1351, %v1353
    %v1355 = vadd.f32 %v1351, %v1354
    %vm1356 = vweird.f32 %v1335
    %vm1357 = vweird.f32 %v1351
    %vm1358 = vmor %vm1356, %vm1357
    %v1359 = vsel %vm1358, %v1351, %v1355
    %v1360 = vand.u32 2147483647, %v1335
    %vm1361 = vcmp.eq.f32.partialorder %v1360, 8.507059e+37
    %v1362 = vand.u32 %v1335, 2147483648
    %v1363 = vor.u32 1.1754944e-38, %v1362
    %v1364 = vsel %vm1361, %v1363, %v1359
    %v1365 = vmul.f32 1.0, %v1364
    %v1366 = vtanh.pop %v1291
    %v1367 = vtanh.pop %v1292
    %v1370 = vrot.slane %v1164, 7
    %v1371 = vrot.slane %v1165, 7
    %v1374 = vmul.f32 %v1350, %v1370
    %v1375 = vmul.f32 %v1365, %v1371
    %1378 = vrot.lane.b32.xlu0 %v1366, 64
    %v1379 = vpop.permute.xlu0 %1378
    %1380 = vrot.lane.b32.xlu0 %v1367, 64
    %v1381 = vpop.permute.xlu0 %1380
    %v1384 = vmul.f32 %v1350, %v1379
    %v1385 = vmul.f32 %v1365, %v1381
    %1388 = vrot.lane.b32.xlu0 %v1384, 32
    %v1389 = vpop.permute.xlu0 %1388
    %1390 = vrot.lane.b32.xlu0 %v1385, 32
    %v1391 = vpop.permute.xlu0 %1390
    %v1394 = vadd.f32 %v1374, %v1389
    %v1395 = vadd.f32 %v1375, %v1391
    %v1396 = vtanh.pop %v1394
    %v1397 = vtanh.pop %v1395
    %1400 = vrot.lane.b32.xlu0 %v1396, 64
    %v1401 = vpop.permute.xlu0 %1400
    %1402 = vrot.lane.b32.xlu0 %v1397, 64
    %v1403 = vpop.permute.xlu0 %1402
    %v1406 = vmul.f32 %v1350, %v1401
    %v1407 = vmul.f32 %v1365, %v1403
    %v1408 = vxor.u32 %v1326, 2147483648
    %v1409 = vxor.u32 %v1327, 2147483648
    %v1410 = vmul.f32 %v1408, 1.442695
    %v1411 = vpow.pop %v1410
    %v1412 = vmul.f32 %v1409, 1.442695
    %v1413 = vpow.pop %v1412
    %v1414 = vadd.f32 %v1411, 1.0
    %v1415 = vadd.f32 %v1413, 1.0
    %v1416 = vrcp.pop %v1414
    %v1417 = vmul.f32 %v1414, %v1416
    %v1418 = vsub.f32 1.0, %v1417
    %v1419 = vmul.f32 %v1416, %v1418
    %v1420 = vadd.f32 %v1416, %v1419
    %vm1421 = vweird.f32 %v1414
    %vm1422 = vweird.f32 %v1416
    %vm1423 = vmor %vm1421, %vm1422
    %v1424 = vsel %vm1423, %v1416, %v1420
    %v1425 = vand.u32 2147483647, %v1414
    %vm1426 = vcmp.eq.f32.partialorder %v1425, 8.507059e+37
    %v1427 = vand.u32 %v1414, 2147483648
    %v1428 = vor.u32 1.1754944e-38, %v1427
    %v1429 = vsel %vm1426, %v1428, %v1424
    %v1430 = vmul.f32 1.0, %v1429
    %v1431 = vrcp.pop %v1415
    %v1432 = vmul.f32 %v1415, %v1431
    %v1433 = vsub.f32 1.0, %v1432
    %v1434 = vmul.f32 %v1431, %v1433
    %v1435 = vadd.f32 %v1431, %v1434
    %vm1436 = vweird.f32 %v1415
    %vm1437 = vweird.f32 %v1431
    %vm1438 = vmor %vm1436, %vm1437
    %v1439 = vsel %vm1438, %v1431, %v1435
    %v1440 = vand.u32 2147483647, %v1415
    %vm1441 = vcmp.eq.f32.partialorder %v1440, 8.507059e+37
    %v1442 = vand.u32 %v1415, 2147483648
    %v1443 = vor.u32 1.1754944e-38, %v1442
    %v1444 = vsel %vm1441, %v1443, %v1439
    %v1445 = vmul.f32 1.0, %v1444
    %v1446 = vtanh.pop %v1326
    %v1447 = vtanh.pop %v1327
    %v1450 = vrot.slane %v1244, 1
    %v1451 = vrot.slane %v1245, 1
    %v1454 = vmul.f32 %v1430, %v1450
    %v1455 = vmul.f32 %v1445, %v1451
    %1458 = vrot.lane.b32.xlu0 %v1446, 64
    %v1459 = vpop.permute.xlu0 %1458
    %1460 = vrot.lane.b32.xlu0 %v1447, 64
    %v1461 = vpop.permute.xlu0 %1460
    %v1464 = vmul.f32 %v1430, %v1459
    %v1465 = vmul.f32 %v1445, %v1461
    %1468 = vrot.lane.b32.xlu0 %v1464, 32
    %v1469 = vpop.permute.xlu0 %1468
    %1470 = vrot.lane.b32.xlu0 %v1465, 32
    %v1471 = vpop.permute.xlu0 %1470
    %v1474 = vadd.f32 %v1454, %v1469
    %v1475 = vadd.f32 %v1455, %v1471
    %v1476 = vtanh.pop %v1474
    %v1477 = vtanh.pop %v1475
    %1480 = vrot.lane.b32.xlu0 %v1476, 64
    %v1481 = vpop.permute.xlu0 %1480
    %1482 = vrot.lane.b32.xlu0 %v1477, 64
    %v1483 = vpop.permute.xlu0 %1482
    %v1486 = vmul.f32 %v1430, %v1481
    %v1487 = vmul.f32 %v1445, %v1483
    %v1488 = vpack.c.bf16 %v1406, %v1406
    %v1489 = vpack.c.bf16 %v1407, %v1407
    %v1492 = vunpack.c.l.b16 %v1488
    %v1493 = vunpack.c.l.b16 %v1489
    %v1494 = vrot.slane %v1492, 5
    %v1495 = vrot.slane %v1493, 4
    %v1496 = vsel %vm347, %v1495, %v1494
    %v1497 = vpack.c.b16 %v1496, %v1496
    %1498 = vrot.lane.b32.xlu0 %v1497, 32
    %v1499 = vpop.permute.xlu0 %1498
    %v1501 = vsel %vm137, %v1499, 0
    %1503 = vmatpush.bf16.msra.mxu0 0
    %1504 = vmatpush.bf16.msra.mxu0 0
    %1505 = vmatpush.bf16.msra.mxu0 0
    %1506 = vmatpush.bf16.msra.mxu0 0
    %1507 = vmatpush.bf16.msra.mxu0 0
    %1508 = vmatpush.bf16.msra.mxu0 0
    %1509 = vmatpush.bf16.msra.mxu0 %v134
    %1510 = vmatpush.bf16.msra.mxu0 %v133
    %1511 = vmatmul.bf16.gmra.mxu0 %v1501
    %v1512 = vpop.f32.mrf.mxu0
    %v1513 = vadd.f32 0.0, %v1512
    %v1514 = vpop.f32.mrf.mxu0
    %1515 = vdwg.mxu0
    %v1517 = vrot.slane %v1513, 2
    %v1518 = vrot.slane %v1513, 3
    %v1521 = vadd.f32 %v99, %v1517
    %v1522 = vadd.f32 %v101, %v1518
    %v1523 = vpack.c.bf16 %v1486, %v1486
    %v1524 = vpack.c.bf16 %v1487, %v1487
    %v1527 = vunpack.c.l.b16 %v1523
    %v1528 = vunpack.c.l.b16 %v1524
    %v1529 = vrot.slane %v1527, 2
    %v1530 = vrot.slane %v1528, 1
    %v1531 = vsel %vm347, %v1530, %v1529
    %v1532 = vpack.c.b16 %v1531, %v1531
    %1533 = vrot.lane.b32.xlu0 %v1532, 32
    %v1534 = vpop.permute.xlu0 %1533
    %v1536 = vsel %vm137, %v1534, 0
    %1538 = vmatpush.bf16.msra.mxu0 0
    %1539 = vmatpush.bf16.msra.mxu0 0
    %1540 = vmatpush.bf16.msra.mxu0 0
    %1541 = vmatpush.bf16.msra.mxu0 0
    %1542 = vmatpush.bf16.msra.mxu0 0
    %1543 = vmatpush.bf16.msra.mxu0 0
    %1544 = vmatpush.bf16.msra.mxu0 %v169
    %1545 = vmatpush.bf16.msra.mxu0 %v168
    %1546 = vmatmul.bf16.gmra.mxu0 %v1536
    %v1547 = vpop.f32.mrf.mxu0
    %v1548 = vadd.f32 0.0, %v1547
    %v1549 = vpop.f32.mrf.mxu0
    %1550 = vdwg.mxu0
    %v1552 = vrot.slane %v1548, 7
    %v1555 = vadd.f32 %v113, %v1552
    %v1556 = vadd.f32 %v115, %v1548
    %v1557 = vxor.u32 %v1521, 2147483648
    %v1558 = vxor.u32 %v1522, 2147483648
    %v1559 = vmul.f32 %v1557, 1.442695
    %v1560 = vpow.pop %v1559
    %v1561 = vmul.f32 %v1558, 1.442695
    %v1562 = vpow.pop %v1561
    %v1563 = vadd.f32 %v1560, 1.0
    %v1564 = vadd.f32 %v1562, 1.0
    %v1565 = vrcp.pop %v1563
    %v1566 = vmul.f32 %v1563, %v1565
    %v1567 = vsub.f32 1.0, %v1566
    %v1568 = vmul.f32 %v1565, %v1567
    %v1569 = vadd.f32 %v1565, %v1568
    %vm1570 = vweird.f32 %v1563
    %vm1571 = vweird.f32 %v1565
    %vm1572 = vmor %vm1570, %vm1571
    %v1573 = vsel %vm1572, %v1565, %v1569
    %v1574 = vand.u32 2147483647, %v1563
    %vm1575 = vcmp.eq.f32.partialorder %v1574, 8.507059e+37
    %v1576 = vand.u32 %v1563, 2147483648
    %v1577 = vor.u32 1.1754944e-38, %v1576
    %v1578 = vsel %vm1575, %v1577, %v1573
    %v1579 = vmul.f32 1.0, %v1578
    %v1580 = vrcp.pop %v1564
    %v1581 = vmul.f32 %v1564, %v1580
    %v1582 = vsub.f32 1.0, %v1581
    %v1583 = vmul.f32 %v1580, %v1582
    %v1584 = vadd.f32 %v1580, %v1583
    %vm1585 = vweird.f32 %v1564
    %vm1586 = vweird.f32 %v1580
    %vm1587 = vmor %vm1585, %vm1586
    %v1588 = vsel %vm1587, %v1580, %v1584
    %v1589 = vand.u32 2147483647, %v1564
    %vm1590 = vcmp.eq.f32.partialorder %v1589, 8.507059e+37
    %v1591 = vand.u32 %v1564, 2147483648
    %v1592 = vor.u32 1.1754944e-38, %v1591
    %v1593 = vsel %vm1590, %v1592, %v1588
    %v1594 = vmul.f32 1.0, %v1593
    %v1595 = vtanh.pop %v1521
    %v1596 = vtanh.pop %v1522
    %v1599 = vrot.slane %v1394, 7
    %v1600 = vrot.slane %v1395, 7
    %v1603 = vmul.f32 %v1579, %v1599
    %v1604 = vmul.f32 %v1594, %v1600
    %1607 = vrot.lane.b32.xlu0 %v1595, 64
    %v1608 = vpop.permute.xlu0 %1607
    %1609 = vrot.lane.b32.xlu0 %v1596, 64
    %v1610 = vpop.permute.xlu0 %1609
    %v1613 = vmul.f32 %v1579, %v1608
    %v1614 = vmul.f32 %v1594, %v1610
    %1617 = vrot.lane.b32.xlu0 %v1613, 32
    %v1618 = vpop.permute.xlu0 %1617
    %1619 = vrot.lane.b32.xlu0 %v1614, 32
    %v1620 = vpop.permute.xlu0 %1619
    %v1623 = vadd.f32 %v1603, %v1618
    %v1624 = vadd.f32 %v1604, %v1620
    %v1625 = vtanh.pop %v1623
    %v1626 = vtanh.pop %v1624
    %1629 = vrot.lane.b32.xlu0 %v1625, 64
    %v1630 = vpop.permute.xlu0 %1629
    %1631 = vrot.lane.b32.xlu0 %v1626, 64
    %v1632 = vpop.permute.xlu0 %1631
    %v1635 = vmul.f32 %v1579, %v1630
    %v1636 = vmul.f32 %v1594, %v1632
    %v1637 = vxor.u32 %v1555, 2147483648
    %v1638 = vxor.u32 %v1556, 2147483648
    %v1639 = vmul.f32 %v1637, 1.442695
    %v1640 = vpow.pop %v1639
    %v1641 = vmul.f32 %v1638, 1.442695
    %v1642 = vpow.pop %v1641
    %v1643 = vadd.f32 %v1640, 1.0
    %v1644 = vadd.f32 %v1642, 1.0
    %v1645 = vrcp.pop %v1643
    %v1646 = vmul.f32 %v1643, %v1645
    %v1647 = vsub.f32 1.0, %v1646
    %v1648 = vmul.f32 %v1645, %v1647
    %v1649 = vadd.f32 %v1645, %v1648
    %vm1650 = vweird.f32 %v1643
    %vm1651 = vweird.f32 %v1645
    %vm1652 = vmor %vm1650, %vm1651
    %v1653 = vsel %vm1652, %v1645, %v1649
    %v1654 = vand.u32 2147483647, %v1643
    %vm1655 = vcmp.eq.f32.partialorder %v1654, 8.507059e+37
    %v1656 = vand.u32 %v1643, 2147483648
    %v1657 = vor.u32 1.1754944e-38, %v1656
    %v1658 = vsel %vm1655, %v1657, %v1653
    %v1659 = vmul.f32 1.0, %v1658
    %v1660 = vrcp.pop %v1644
    %v1661 = vmul.f32 %v1644, %v1660
    %v1662 = vsub.f32 1.0, %v1661
    %v1663 = vmul.f32 %v1660, %v1662
    %v1664 = vadd.f32 %v1660, %v1663
    %vm1665 = vweird.f32 %v1644
    %vm1666 = vweird.f32 %v1660
    %vm1667 = vmor %vm1665, %vm1666
    %v1668 = vsel %vm1667, %v1660, %v1664
    %v1669 = vand.u32 2147483647, %v1644
    %vm1670 = vcmp.eq.f32.partialorder %v1669, 8.507059e+37
    %v1671 = vand.u32 %v1644, 2147483648
    %v1672 = vor.u32 1.1754944e-38, %v1671
    %v1673 = vsel %vm1670, %v1672, %v1668
    %v1674 = vmul.f32 1.0, %v1673
    %v1675 = vtanh.pop %v1555
    %v1676 = vtanh.pop %v1556
    %v1679 = vrot.slane %v1474, 1
    %v1680 = vrot.slane %v1475, 1
    %v1683 = vmul.f32 %v1659, %v1679
    %v1684 = vmul.f32 %v1674, %v1680
    %1687 = vrot.lane.b32.xlu0 %v1675, 64
    %v1688 = vpop.permute.xlu0 %1687
    %1689 = vrot.lane.b32.xlu0 %v1676, 64
    %v1690 = vpop.permute.xlu0 %1689
    %v1693 = vmul.f32 %v1659, %v1688
    %v1694 = vmul.f32 %v1674, %v1690
    %1697 = vrot.lane.b32.xlu0 %v1693, 32
    %v1698 = vpop.permute.xlu0 %1697
    %1699 = vrot.lane.b32.xlu0 %v1694, 32
    %v1700 = vpop.permute.xlu0 %1699
    %v1703 = vadd.f32 %v1683, %v1698
    %v1704 = vadd.f32 %v1684, %v1700
    %v1705 = vtanh.pop %v1703
    %v1706 = vtanh.pop %v1704
    %1709 = vrot.lane.b32.xlu0 %v1705, 64
    %v1710 = vpop.permute.xlu0 %1709
    %1711 = vrot.lane.b32.xlu0 %v1706, 64
    %v1712 = vpop.permute.xlu0 %1711
    %v1715 = vmul.f32 %v1659, %v1710
    %v1716 = vmul.f32 %v1674, %v1712
    %v1717 = vpack.c.bf16 %v1635, %v1635
    %v1718 = vpack.c.bf16 %v1636, %v1636
    %v1721 = vunpack.c.l.b16 %v1717
    %v1722 = vunpack.c.l.b16 %v1718
    %v1723 = vrot.slane %v1721, 6
    %v1724 = vrot.slane %v1722, 5
    %v1725 = vsel %vm347, %v1724, %v1723
    %v1726 = vpack.c.b16 %v1725, %v1725
    %1727 = vrot.lane.b32.xlu0 %v1726, 32
    %v1728 = vpop.permute.xlu0 %1727
    %v1730 = vsel %vm137, %v1728, 0
    %1732 = vmatpush.bf16.msra.mxu0 0
    %1733 = vmatpush.bf16.msra.mxu0 0
    %1734 = vmatpush.bf16.msra.mxu0 0
    %1735 = vmatpush.bf16.msra.mxu0 0
    %1736 = vmatpush.bf16.msra.mxu0 0
    %1737 = vmatpush.bf16.msra.mxu0 0
    %1738 = vmatpush.bf16.msra.mxu0 %v134
    %1739 = vmatpush.bf16.msra.mxu0 %v133
    %1740 = vmatmul.bf16.gmra.mxu0 %v1730
    %v1741 = vpop.f32.mrf.mxu0
    %v1742 = vadd.f32 0.0, %v1741
    %v1743 = vpop.f32.mrf.mxu0
    %1744 = vdwg.mxu0
    %v1746 = vrot.slane %v1742, 1
    %v1747 = vrot.slane %v1742, 2
    %v1750 = vadd.f32 %v99, %v1746
    %v1751 = vadd.f32 %v101, %v1747
    %v1752 = vpack.c.bf16 %v1715, %v1715
    %v1753 = vpack.c.bf16 %v1716, %v1716
    %v1756 = vunpack.c.l.b16 %v1752
    %v1757 = vunpack.c.l.b16 %v1753
    %v1758 = vrot.slane %v1756, 1
    %v1759 = vsel %vm347, %v1757, %v1758
    %v1760 = vpack.c.b16 %v1759, %v1759
    %1761 = vrot.lane.b32.xlu0 %v1760, 32
    %v1762 = vpop.permute.xlu0 %1761
    %v1764 = vsel %vm137, %v1762, 0
    %1766 = vmatpush.bf16.msra.mxu0 0
    %1767 = vmatpush.bf16.msra.mxu0 0
    %1768 = vmatpush.bf16.msra.mxu0 0
    %1769 = vmatpush.bf16.msra.mxu0 0
    %1770 = vmatpush.bf16.msra.mxu0 0
    %1771 = vmatpush.bf16.msra.mxu0 0
    %1772 = vmatpush.bf16.msra.mxu0 %v169
    %1773 = vmatpush.bf16.msra.mxu0 %v168
    %1774 = vmatmul.bf16.gmra.mxu0 %v1764
    %v1775 = vpop.f32.mrf.mxu0
    %v1776 = vadd.f32 0.0, %v1775
    %v1777 = vpop.f32.mrf.mxu0
    %1778 = vdwg.mxu0
    %v1780 = vrot.slane %v1776, 1
    %v1783 = vadd.f32 %v113, %v1776
    %v1784 = vadd.f32 %v115, %v1780
    %v1785 = vxor.u32 %v1750, 2147483648
    %v1786 = vxor.u32 %v1751, 2147483648
    %v1787 = vmul.f32 %v1785, 1.442695
    %v1788 = vpow.pop %v1787
    %v1789 = vmul.f32 %v1786, 1.442695
    %v1790 = vpow.pop %v1789
    %v1791 = vadd.f32 %v1788, 1.0
    %v1792 = vadd.f32 %v1790, 1.0
    %v1793 = vrcp.pop %v1791
    %v1794 = vmul.f32 %v1791, %v1793
    %v1795 = vsub.f32 1.0, %v1794
    %v1796 = vmul.f32 %v1793, %v1795
    %v1797 = vadd.f32 %v1793, %v1796
    %vm1798 = vweird.f32 %v1791
    %vm1799 = vweird.f32 %v1793
    %vm1800 = vmor %vm1798, %vm1799
    %v1801 = vsel %vm1800, %v1793, %v1797
    %v1802 = vand.u32 2147483647, %v1791
    %vm1803 = vcmp.eq.f32.partialorder %v1802, 8.507059e+37
    %v1804 = vand.u32 %v1791, 2147483648
    %v1805 = vor.u32 1.1754944e-38, %v1804
    %v1806 = vsel %vm1803, %v1805, %v1801
    %v1807 = vmul.f32 1.0, %v1806
    %v1808 = vrcp.pop %v1792
    %v1809 = vmul.f32 %v1792, %v1808
    %v1810 = vsub.f32 1.0, %v1809
    %v1811 = vmul.f32 %v1808, %v1810
    %v1812 = vadd.f32 %v1808, %v1811
    %vm1813 = vweird.f32 %v1792
    %vm1814 = vweird.f32 %v1808
    %vm1815 = vmor %vm1813, %vm1814
    %v1816 = vsel %vm1815, %v1808, %v1812
    %v1817 = vand.u32 2147483647, %v1792
    %vm1818 = vcmp.eq.f32.partialorder %v1817, 8.507059e+37
    %v1819 = vand.u32 %v1792, 2147483648
    %v1820 = vor.u32 1.1754944e-38, %v1819
    %v1821 = vsel %vm1818, %v1820, %v1816
    %v1822 = vmul.f32 1.0, %v1821
    %v1823 = vtanh.pop %v1750
    %v1824 = vtanh.pop %v1751
    %v1827 = vrot.slane %v1623, 7
    %v1828 = vrot.slane %v1624, 7
    %v1831 = vmul.f32 %v1807, %v1827
    %v1832 = vmul.f32 %v1822, %v1828
    %1835 = vrot.lane.b32.xlu0 %v1823, 64
    %v1836 = vpop.permute.xlu0 %1835
    %1837 = vrot.lane.b32.xlu0 %v1824, 64
    %v1838 = vpop.permute.xlu0 %1837
    %v1841 = vmul.f32 %v1807, %v1836
    %v1842 = vmul.f32 %v1822, %v1838
    %1845 = vrot.lane.b32.xlu0 %v1841, 32
    %v1846 = vpop.permute.xlu0 %1845
    %1847 = vrot.lane.b32.xlu0 %v1842, 32
    %v1848 = vpop.permute.xlu0 %1847
    %v1851 = vadd.f32 %v1831, %v1846
    %v1852 = vadd.f32 %v1832, %v1848
    %v1853 = vtanh.pop %v1851
    %v1854 = vtanh.pop %v1852
    %1857 = vrot.lane.b32.xlu0 %v1853, 64
    %v1858 = vpop.permute.xlu0 %1857
    %1859 = vrot.lane.b32.xlu0 %v1854, 64
    %v1860 = vpop.permute.xlu0 %1859
    %v1863 = vmul.f32 %v1807, %v1858
    %v1864 = vmul.f32 %v1822, %v1860
    %v1865 = vxor.u32 %v1783, 2147483648
    %v1866 = vxor.u32 %v1784, 2147483648
    %v1867 = vmul.f32 %v1865, 1.442695
    %v1868 = vpow.pop %v1867
    %v1869 = vmul.f32 %v1866, 1.442695
    %v1870 = vpow.pop %v1869
    %v1871 = vadd.f32 %v1868, 1.0
    %v1872 = vadd.f32 %v1870, 1.0
    %v1873 = vrcp.pop %v1871
    %v1874 = vmul.f32 %v1871, %v1873
    %v1875 = vsub.f32 1.0, %v1874
    %v1876 = vmul.f32 %v1873, %v1875
    %v1877 = vadd.f32 %v1873, %v1876
    %vm1878 = vweird.f32 %v1871
    %vm1879 = vweird.f32 %v1873
    %vm1880 = vmor %vm1878, %vm1879
    %v1881 = vsel %vm1880, %v1873, %v1877
    %v1882 = vand.u32 2147483647, %v1871
    %vm1883 = vcmp.eq.f32.partialorder %v1882, 8.507059e+37
    %v1884 = vand.u32 %v1871, 2147483648
    %v1885 = vor.u32 1.1754944e-38, %v1884
    %v1886 = vsel %vm1883, %v1885, %v1881
    %v1887 = vmul.f32 1.0, %v1886
    %v1888 = vrcp.pop %v1872
    %v1889 = vmul.f32 %v1872, %v1888
    %v1890 = vsub.f32 1.0, %v1889
    %v1891 = vmul.f32 %v1888, %v1890
    %v1892 = vadd.f32 %v1888, %v1891
    %vm1893 = vweird.f32 %v1872
    %vm1894 = vweird.f32 %v1888
    %vm1895 = vmor %vm1893, %vm1894
    %v1896 = vsel %vm1895, %v1888, %v1892
    %v1897 = vand.u32 2147483647, %v1872
    %vm1898 = vcmp.eq.f32.partialorder %v1897, 8.507059e+37
    %v1899 = vand.u32 %v1872, 2147483648
    %v1900 = vor.u32 1.1754944e-38, %v1899
    %v1901 = vsel %vm1898, %v1900, %v1896
    %v1902 = vmul.f32 1.0, %v1901
    %v1903 = vtanh.pop %v1783
    %v1904 = vtanh.pop %v1784
    %v1907 = vrot.slane %v1703, 1
    %v1908 = vrot.slane %v1704, 1
    %v1911 = vmul.f32 %v1887, %v1907
    %v1912 = vmul.f32 %v1902, %v1908
    %1915 = vrot.lane.b32.xlu0 %v1903, 64
    %v1916 = vpop.permute.xlu0 %1915
    %1917 = vrot.lane.b32.xlu0 %v1904, 64
    %v1918 = vpop.permute.xlu0 %1917
    %v1921 = vmul.f32 %v1887, %v1916
    %v1922 = vmul.f32 %v1902, %v1918
    %1925 = vrot.lane.b32.xlu0 %v1921, 32
    %v1926 = vpop.permute.xlu0 %1925
    %1927 = vrot.lane.b32.xlu0 %v1922, 32
    %v1928 = vpop.permute.xlu0 %1927
    %v1931 = vadd.f32 %v1911, %v1926
    %v1932 = vadd.f32 %v1912, %v1928
    %v1933 = vtanh.pop %v1931
    %v1934 = vtanh.pop %v1932
    %1937 = vrot.lane.b32.xlu0 %v1933, 64
    %v1938 = vpop.permute.xlu0 %1937
    %1939 = vrot.lane.b32.xlu0 %v1934, 64
    %v1940 = vpop.permute.xlu0 %1939
    %v1943 = vmul.f32 %v1887, %v1938
    %v1944 = vmul.f32 %v1902, %v1940
    %v1947 = vrot.slane %v1864, 7
    %1948 = vrot.lane.b32.xlu0 %v1863, 32
    %v1949 = vpop.permute.xlu0 %1948
    %1950 = vrot.lane.b32.xlu0 %v1947, 32
    %v1951 = vpop.permute.xlu0 %1950
    %v1956 = vrot.slane %v1943, 1
    %1957 = vrot.lane.b32.xlu0 %v1956, 64
    %v1958 = vpop.permute.xlu0 %1957
    %1959 = vrot.lane.b32.xlu0 %v1944, 64
    %v1960 = vpop.permute.xlu0 %1959
    %v1963 = vsel %vm137, %v1949, %v1958
    %v1964 = vsel %vm137, %v1951, %v1960
    %v1965 = vpack.c.bf16 %v1964, %v1963
    %v1966 = vld [vmem:[%s5] sm:$0xf]
    %v1967 = vld [vmem:[%s5 + $0x4] sm:$0xf]
    %v1968 = vld [vmem:[%s5 + $0x8] sm:$0xf]
    %v1969 = vld [vmem:[%s5 + $0xc] sm:$0xf]
    %v1970 = vld [vmem:[%s5 + $0x10] sm:$0xf]
    %v1971 = vld [vmem:[%s5 + $0x14] sm:$0xf]
    %v1972 = vld [vmem:[%s5 + $0x18] sm:$0xf]
    %v1973 = vld [vmem:[%s5 + $0x1c] sm:$0xf]
    %v1974 = vld [vmem:[%s6] sm:$0x1]
    %v1976 = vperm.slane %v1974, 0
    %v1979 = vshrl.u32 %v1965, 16
    %v1981 = vrot.slane %v1979, 3
    %v1982 = vshll.u32 %v1965, 16
    %v1984 = vrot.slane %v1982, 4
    %v1985 = vor.u32 %v1981, %v1984
    %v1994 = vunpack.c.l.b16 %v1966
    %v1995 = vunpack.c.l.b16 %v1967
    %v1996 = vunpack.c.l.b16 %v1968
    %v1997 = vunpack.c.l.b16 %v1969
    %v1998 = vunpack.c.l.b16 %v1970
    %v1999 = vunpack.c.l.b16 %v1971
    %v2000 = vunpack.c.l.b16 %v1972
    %v2001 = vunpack.c.l.b16 %v1973
    %v2002 = vpack.c.b16 %v1995, %v1994
    %v2003 = vpack.c.b16 %v1997, %v1996
    %v2004 = vpack.c.b16 %v1999, %v1998
    %v2005 = vpack.c.b16 %v2001, %v2000
    %vm2010 = vcmask 523264
    %v2012 = vsel %vm2010, %v1985, 0
    %2014 = vmatpush.bf16.msra.mxu0 0
    %2015 = vmatpush.bf16.msra.mxu0 0
    %2016 = vmatpush.bf16.msra.mxu0 0
    %2017 = vmatpush.bf16.msra.mxu0 0
    %2018 = vmatpush.bf16.msra.mxu0 %v2005
    %2019 = vmatpush.bf16.msra.mxu0 %v2004
    %2020 = vmatpush.bf16.msra.mxu0 %v2003
    %2021 = vmatpush.bf16.msra.mxu0 %v2002
    %2022 = vmatmul.bf16.gmra.mxu0 %v2012
    %v2023 = vpop.f32.mrf.mxu0
    %v2024 = vadd.f32 %v1976, %v2023
    %v2025 = vpop.f32.mrf.mxu0
    %2026 = vdwg.mxu0
    %vm2027 = vcmask 58368
    %2028 = vst.msk [vmem:[#allocation7] sm:$0x3] %vm2027, %v2024
    // Predicated region
    $region38: #{tpu_custom_call.1} parent=1 // pred_check
      _
    $region39: #{tpu_custom_call.1} parent=1 // pred_check_branch
      %2030 = sbr.rel (0) target = $region41
    $region40: #{tpu_custom_call.1} parent=1 // pred_region
      %2032 = vsyncadd [#allocation4], 0
      %s2034 = sshll.u32 [#allocation7], 4
      %s2035 = int_to_ptr.vmem [resolvable:$true] %s2034
      %s2036 = sshll.u32 %s7, 4
      %s2037 = int_to_ptr.hbm [resolvable:$true] %s2036
      %2039 = dma.vmem_to_hbm [thread:$0]  %s2035, 32, %s2037, [#allocation4]
    $region41: #{tpu_custom_call.1} parent=1 // pred_fallthru
      _
    // Predicated region
    $region42: #{tpu_custom_call.1} parent=1 // pred_check
      _
    $region43: #{tpu_custom_call.1} parent=1 // pred_check_branch
      %2041 = sbr.rel (0) target = $region45
    $region44: #{tpu_custom_call.1} parent=1 // pred_region
      %2043 = dma.done [#allocation4], 32
    $region45: #{tpu_custom_call.1} parent=1 // pred_fallthru
      _
    %2044 = vsyncpa [#allocation3], 1
    %2045 = vsyncpa [#allocation6], 1
    %2046 = vsyncpa [#allocation4], 1

</llo_original>
